<compile_context>
chip_gen: v7x
topology: tpu7x:2x2x1
jax: 0.10.0
libtpu: 0.0.40
codegen_flags: <defaults>
</compile_context>

<pallas_src>
import functools

import jax
import jax.numpy as jnp
from jax.experimental import pallas as pl
from jax.experimental.pallas import tpu as pltpu


def _round_up(x, m):
    return (x + m - 1) // m * m


def _rpn_kernel(x_ref, w_ref, b_ref, out_ref, *, A, HT, W, C):
    """One (batch, row-tile) grid step.

    x_ref  : (1, HT+2, W+2, C) bf16  raw NHWC slab incl. 3x3 halo (zero padded)
    w_ref  : (9*C, CH)         bf16  folded rpn_conv @ [score | 0 | bbox | 0]
    b_ref  : (1, CH)           f32   folded bias (b_conv folded through heads)
    out_ref: (1, HT*W, CH)     f32   [cls prob (2A) | 0 (A) | bbox (4A) | pad]
    """
    x = x_ref[0]                                           # (HT+2, W+2, C)

    # In-kernel im2col: 9 shifted halo views -> (HT*W, 9*C).  Stays in VMEM;
    # HBM only ever sees the raw (~1.1x) NHWC bytes.
    taps = [x[dy:dy + HT, dx:dx + W, :] for dy in range(3) for dx in range(3)]
    cols = jnp.concatenate(taps, axis=-1).reshape(HT * W, 9 * C)

    # Single MXU dot against the pre-folded conv+head weight (K accumulates
    # inside the MXU; no 512-wide intermediate, no accumulator scratch).
    head = jnp.dot(cols, w_ref[...], preferred_element_type=jnp.float32)
    head = head + b_ref[...]

    # Lane-dense paired softmax: score lane a (class 0) pairs with lane a+A
    # (class 1), matching PyTorch's view(N, 2, A*H, W) + softmax(dim=1).
    # Because lanes [2A, 3A) and the tail are exact zeros, roll(+A)+roll(-A)
    # gives each score lane its true partner independent of roll direction.
    CH = head.shape[-1]
    partner = pltpu.roll(head, A, axis=1) + pltpu.roll(head, CH - A, axis=1)
    m = jnp.maximum(head, partner)
    e_self = jnp.exp(head - m)
    e_pair = jnp.exp(partner - m)
    inv = pl.reciprocal(e_self + e_pair, approx=True)      # EUP, off the VALU

    lane = jax.lax.broadcasted_iota(jnp.int32, head.shape, 1)
    # Full-width select + single unmasked lane-dense store (no concatenate).
    out_ref[0] = jnp.where(lane < 2 * A, e_self * inv, head)


def rpn_forward(feature_nchw, params, *, num_anchors, row_tile_h=8):
    """feature_nchw: [N, Cin, H, W] float32 (output of _image_to_head).

    Returns (rpn_cls_prob_final [N,H,W,2A], rpn_bbox_score [N,H,W,4A],
             feature [N,Cin,H,W]).
    """
    N, Cin, H, W = feature_nchw.shape
    A = num_anchors
    C_MID = params["w_conv"].shape[0]          # 512 in the original module
    C = _round_up(Cin, 128)                    # lane-pad channels (aligned taps)
    K = 9 * C
    CH = _round_up(8 * A, 128)                 # [2A scores | A gap | 4A bbox | pad]
    HT = min(row_tile_h, H)                    # output rows per grid step
    nH = pl.cdiv(H, HT)
    Hp = nH * HT

    # NCHW -> NHWC, bf16 FIRST (halves wrapper HBM traffic), one pad for the
    # 3x3 halo + channel lanes, then overlapping row-tile windows
    # (~(HT+2)/HT x raw bytes; the 9x im2col inflation is gone).
    x = jnp.transpose(feature_nchw, (0, 2, 3, 1)).astype(jnp.bfloat16)
    x = jnp.pad(x, ((0, 0), (1, 1 + Hp - H), (1, 1), (0, C - Cin)))
    x_win = jnp.stack([x[:, t * HT:t * HT + HT + 2] for t in range(nH)], axis=1)
    x_win = x_win.reshape(N * nH, HT + 2, W + 2, C)

    # Fold the (purely linear -- no activation after rpn_conv in the module)
    # chain offline:
    #   (im2col(x) @ Wc + bc) @ [Ws|0|Wb] + [bs|0|bb]
    #     == im2col(x) @ (Wc @ [Ws|0|Wb]) + (bc @ [Ws|0|Wb] + [bs|0|bb])
    w_conv = jnp.transpose(params["w_conv"], (2, 3, 1, 0))          # (3,3,Cin,C_MID)
    w_conv = jnp.pad(w_conv, ((0, 0), (0, 0), (0, C - Cin), (0, 0)))
    w_conv = w_conv.reshape(K, C_MID)                               # f32
    w_head = jnp.concatenate(
        [jnp.transpose(params["w_score"][:, :, 0, 0], (1, 0)),      # (C_MID, 2A)
         jnp.zeros((C_MID, A), jnp.float32),                        # zero gap
         jnp.transpose(params["w_bbox"][:, :, 0, 0], (1, 0))],      # (C_MID, 4A)
        axis=-1)                                                    # (C_MID, 7A)
    b_head = jnp.concatenate(
        [params["b_score"], jnp.zeros((A,), jnp.float32), params["b_bbox"]])
    w_fused = w_conv @ w_head                                       # (K, 7A) f32
    b_fused = params["b_conv"] @ w_head + b_head                    # (7A,)
    w_fused = jnp.pad(w_fused, ((0, 0), (0, CH - 7 * A))).astype(jnp.bfloat16)
    b_fused = jnp.pad(b_fused, (0, CH - 7 * A)).reshape(1, CH).astype(jnp.float32)

    kernel = functools.partial(_rpn_kernel, A=A, HT=HT, W=W, C=C)

    fused = pl.pallas_call(
        kernel,
        out_shape=jax.ShapeDtypeStruct((N * nH, HT * W, CH), jnp.float32),
        grid_spec=pltpu.PrefetchScalarGridSpec(
            num_scalar_prefetch=0,
            grid=(N * nH,),
            in_specs=[
                pl.BlockSpec((1, HT + 2, W + 2, C), lambda i: (i, 0, 0, 0)),
                pl.BlockSpec((K, CH), lambda i: (0, 0)),     # grid-invariant
                pl.BlockSpec((1, CH), lambda i: (0, 0)),     # grid-invariant
            ],
            out_specs=pl.BlockSpec((1, HT * W, CH), lambda i: (i, 0, 0)),
        ),
        compiler_params=pltpu.CompilerParams(
            dimension_semantics=("parallel",),
            vmem_limit_bytes=32 * 1024 * 1024),
    )(x_win, w_fused, b_fused)

    fused = fused.reshape(N, Hp, W, CH)[:, :H]
    prob = fused[..., :2 * A]                        # (N, H, W, 2A)
    bbox = fused[..., 3 * A:7 * A]                   # (N, H, W, 4A)

    # TODO(synk): proposal_layer (anchor decode + clip + top-k + NMS) and the
    # training-only anchor_target_layer / losses are not Pallas-translatable
    # here; rois/scores are therefore not produced.
    return prob, bbox, feature_nchw


def _reference(feature_nchw, params, *, num_anchors):
    """Pure-JAX f32 NCHW reference matching the PyTorch forward."""
    A = num_anchors
    dn = jax.lax.conv_dimension_numbers(feature_nchw.shape,
                                        params["w_conv"].shape,
                                        ("NCHW", "OIHW", "NCHW"))
    rpn_feat = jax.lax.conv_general_dilated(
        feature_nchw, params["w_conv"], (1, 1), ((1, 1), (1, 1)),
        dimension_numbers=dn) + params["b_conv"][None, :, None, None]
    cls = jax.lax.conv_general_dilated(
        rpn_feat, params["w_score"], (1, 1), ((0, 0), (0, 0)),
        dimension_numbers=dn) + params["b_score"][None, :, None, None]
    bbox = jax.lax.conv_general_dilated(
        rpn_feat, params["w_bbox"], (1, 1), ((0, 0), (0, 0)),
        dimension_numbers=dn) + params["b_bbox"][None, :, None, None]
    N, _, H, W = cls.shape
    cls_r = cls.reshape(N, 2, A * H, W)
    prob = jax.nn.softmax(cls_r, axis=1)
    prob_final = prob.reshape(N, 2 * A, H, W).transpose(0, 2, 3, 1)
    bbox_final = bbox.transpose(0, 2, 3, 1)
    return prob_final, bbox_final


if __name__ == "__main__":
    key = jax.random.PRNGKey(0)
    N, Cin, H, W = 2, 4, 16, 16     # small "head" feature map
    A = 3                           # num_anchors
    C_MID = 512                     # fixed by the module (rpn_conv out channels)

    ks = jax.random.split(key, 8)
    params = {
        "w_conv": 0.05 * jax.random.normal(ks[0], (C_MID, Cin, 3, 3), jnp.float32),
        "b_conv": 0.01 * jax.random.normal(ks[1], (C_MID,), jnp.float32),
        "w_score": 0.05 * jax.random.normal(ks[2], (2 * A, C_MID, 1, 1), jnp.float32),
        "b_score": 0.01 * jax.random.normal(ks[3], (2 * A,), jnp.float32),
        "w_bbox": 0.05 * jax.random.normal(ks[4], (4 * A, C_MID, 1, 1), jnp.float32),
        "b_bbox": 0.01 * jax.random.normal(ks[5], (4 * A,), jnp.float32),
    }
    feature = jax.random.normal(ks[6], (N, Cin, H, W), jnp.float32)

    prob, bbox, feat_out = rpn_forward(feature, params, num_anchors=A)
    jax.block_until_ready((prob, bbox, feat_out))

    prob_ref, bbox_ref = _reference(feature, params, num_anchors=A)
    assert prob.shape == (N, H, W, 2 * A) and bbox.shape == (N, H, W, 4 * A)
    # bf16 inputs / folded bf16 weights with f32 MXU accumulation and an
    # approximate EUP reciprocal -> loosened tolerance.
    assert jnp.allclose(prob, prob_ref, rtol=3e-2, atol=3e-2)
    assert jnp.allclose(bbox, bbox_ref, rtol=3e-2, atol=3e-2)
    print("KERNEL_OK")
</pallas_src>

<mosaic_0001>
module attributes {stable_mosaic.version = 11 : i64} {
  func.func @_rpn_kernel(%arg0: i32, %arg1: memref<1x10x18x128xbf16, #tpu.memory_space<vmem>>, %arg2: memref<1152x128xbf16, #tpu.memory_space<vmem>>, %arg3: memref<1x128xf32, #tpu.memory_space<vmem>>, %arg4: memref<1x128x128xf32, #tpu.memory_space<vmem>>) attributes {dimension_semantics = [#tpu.dimension_semantics<parallel>], iteration_bounds = array<i64: 4>, scalar_prefetch = 0 : i64, scratch_operands = 0 : i64, tpu.core_type = #tpu.core_type<tc>, window_params = [{transform_indices = @transform_0, window_bounds = array<i64: 1, 10, 18, 128>}, {pipeline_mode = #tpu.pipeline_mode<synchronous>, transform_indices = @transform_1, window_bounds = array<i64: 1152, 128>}, {pipeline_mode = #tpu.pipeline_mode<synchronous>, transform_indices = @transform_2, window_bounds = array<i64: 1, 128>}, {transform_indices = @transform_3, window_bounds = array<i64: 1, 128, 128>}]} {
    %c0 = arith.constant 0 : index
    %c0_0 = arith.constant 0 : index
    %c0_1 = arith.constant 0 : index
    %c0_2 = arith.constant 0 : index
    %0 = vector.load %arg1[%c0, %c0_0, %c0_1, %c0_2] : memref<1x10x18x128xbf16, #tpu.memory_space<vmem>>, vector<1x10x18x128xbf16>
    %1 = vector.shape_cast %0 : vector<1x10x18x128xbf16> to vector<10x18x128xbf16>
    %2 = vector.extract_strided_slice %1 {offsets = [0, 0, 0], sizes = [8, 16, 128], strides = [1, 1, 1]} : vector<10x18x128xbf16> to vector<8x16x128xbf16>
    %3 = vector.extract_strided_slice %1 {offsets = [0, 1, 0], sizes = [8, 16, 128], strides = [1, 1, 1]} : vector<10x18x128xbf16> to vector<8x16x128xbf16>
    %4 = vector.extract_strided_slice %1 {offsets = [0, 2, 0], sizes = [8, 16, 128], strides = [1, 1, 1]} : vector<10x18x128xbf16> to vector<8x16x128xbf16>
    %5 = vector.extract_strided_slice %1 {offsets = [1, 0, 0], sizes = [8, 16, 128], strides = [1, 1, 1]} : vector<10x18x128xbf16> to vector<8x16x128xbf16>
    %6 = vector.extract_strided_slice %1 {offsets = [1, 1, 0], sizes = [8, 16, 128], strides = [1, 1, 1]} : vector<10x18x128xbf16> to vector<8x16x128xbf16>
    %7 = vector.extract_strided_slice %1 {offsets = [1, 2, 0], sizes = [8, 16, 128], strides = [1, 1, 1]} : vector<10x18x128xbf16> to vector<8x16x128xbf16>
    %8 = vector.extract_strided_slice %1 {offsets = [2, 0, 0], sizes = [8, 16, 128], strides = [1, 1, 1]} : vector<10x18x128xbf16> to vector<8x16x128xbf16>
    %9 = vector.extract_strided_slice %1 {offsets = [2, 1, 0], sizes = [8, 16, 128], strides = [1, 1, 1]} : vector<10x18x128xbf16> to vector<8x16x128xbf16>
    %10 = vector.extract_strided_slice %1 {offsets = [2, 2, 0], sizes = [8, 16, 128], strides = [1, 1, 1]} : vector<10x18x128xbf16> to vector<8x16x128xbf16>
    %11 = tpu.concatenate %2, %3, %4, %5, %6, %7, %8, %9, %10 in 2 : vector<8x16x128xbf16>, vector<8x16x128xbf16>, vector<8x16x128xbf16>, vector<8x16x128xbf16>, vector<8x16x128xbf16>, vector<8x16x128xbf16>, vector<8x16x128xbf16>, vector<8x16x128xbf16>, vector<8x16x128xbf16> -> vector<8x16x1152xbf16>
    %12 = vector.shape_cast %11 : vector<8x16x1152xbf16> to vector<128x1152xbf16>
    %c0_3 = arith.constant 0 : index
    %c0_4 = arith.constant 0 : index
    %13 = vector.load %arg2[%c0_3, %c0_4] : memref<1152x128xbf16, #tpu.memory_space<vmem>>, vector<1152x128xbf16>
    %cst = arith.constant dense<0.000000e+00> : vector<128x128xf32>
    %14 = tpu.matmul %12, %13, %cst {dimension_numbers = #tpu.dot_dimension_numbers<[1], [0], [0], [1], [0, 0, 1, 1], [], []>} : vector<128x1152xbf16>, vector<1152x128xbf16>, vector<128x128xf32> -> vector<128x128xf32>
    %c0_5 = arith.constant 0 : index
    %c0_6 = arith.constant 0 : index
    %15 = vector.load %arg3[%c0_5, %c0_6] : memref<1x128xf32, #tpu.memory_space<vmem>>, vector<1x128xf32>
    %16 = vector.broadcast %15 : vector<1x128xf32> to vector<128x128xf32>
    %17 = arith.addf %14, %16 : vector<128x128xf32>
    %c3_i32 = arith.constant 3 : i32
    %18 = tpu.dynamic_rotate %17 by %c3_i32 dim 1 : vector<128x128xf32>, i32 -> vector<128x128xf32>
    %c125_i32 = arith.constant 125 : i32
    %19 = tpu.dynamic_rotate %17 by %c125_i32 dim 1 : vector<128x128xf32>, i32 -> vector<128x128xf32>
    %20 = arith.addf %18, %19 : vector<128x128xf32>
    %21 = arith.maximumf %17, %20 : vector<128x128xf32>
    %22 = arith.subf %17, %21 : vector<128x128xf32>
    %23 = math.exp %22 : vector<128x128xf32>
    %24 = arith.subf %20, %21 : vector<128x128xf32>
    %25 = math.exp %24 : vector<128x128xf32>
    %26 = arith.addf %23, %25 : vector<128x128xf32>
    %27 = tpu.reciprocal %26 {approx = true} : vector<128x128xf32> -> vector<128x128xf32>
    %28 = tpu.iota {dimensions = array<i32: 1>} : vector<128x128xi32>
    %c6_i32 = arith.constant 6 : i32
    %29 = vector.broadcast %c6_i32 : i32 to vector<128x128xi32>
    %30 = arith.cmpi slt, %28, %29 : vector<128x128xi32>
    %31 = arith.mulf %23, %27 : vector<128x128xf32>
    %32 = arith.select %30, %31, %17 : vector<128x128xi1>, vector<128x128xf32>
    %c0_7 = arith.constant 0 : index
    %c0_8 = arith.constant 0 : index
    %c0_9 = arith.constant 0 : index
    %33 = vector.load %arg4[%c0_7, %c0_8, %c0_9] : memref<1x128x128xf32, #tpu.memory_space<vmem>>, vector<1x128x128xf32>
    %34 = vector.shape_cast %33 : vector<1x128x128xf32> to vector<128x128xf32>
    %35 = vector.shape_cast %32 : vector<128x128xf32> to vector<1x128x128xf32>
    tpu.vector_store %arg4[%c0_7, %c0_8, %c0_9], %35 {strides = array<i32>} : memref<1x128x128xf32, #tpu.memory_space<vmem>>, vector<1x128x128xf32>,
    return
  }
  func.func @transform_0(%arg0: i32) -> (i32, i32, i32, i32) {
    %c0_i32 = arith.constant 0 : i32
    %c0_i32_0 = arith.constant 0 : i32
    %c0_i32_1 = arith.constant 0 : i32
    %c0_i32_2 = arith.constant 0 : i32
    return %arg0, %c0_i32, %c0_i32_0, %c0_i32_1 : i32, i32, i32, i32
  }
  func.func @transform_1(%arg0: i32) -> (i32, i32) {
    %c0_i32 = arith.constant 0 : i32
    %c0_i32_0 = arith.constant 0 : i32
    %c0_i32_1 = arith.constant 0 : i32
    return %c0_i32, %c0_i32_0 : i32, i32
  }
  func.func @transform_2(%arg0: i32) -> (i32, i32) {
    %c0_i32 = arith.constant 0 : i32
    %c0_i32_0 = arith.constant 0 : i32
    %c0_i32_1 = arith.constant 0 : i32
    return %c0_i32, %c0_i32_0 : i32, i32
  }
  func.func @transform_3(%arg0: i32) -> (i32, i32, i32) {
    %c0_i32 = arith.constant 0 : i32
    %c0_i32_0 = arith.constant 0 : i32
    %c0_i32_1 = arith.constant 0 : i32
    return %arg0, %c0_i32, %c0_i32_0 : i32, i32, i32
  }
}

</mosaic_0001>

<llo_original>
// kernel: tpu_custom_call.1
$region0: #{tpu_custom_call.1}
  #allocation0 [shape = 'u32[]', space=smem, size = 0x4, offset = 0x4, fixed_abs, tag = 'smem constant byte address 0x4 - core index']
  #allocation1 [shape = 'u32[144,128]{1,0:T(1,128)}', space=vmem, size = 0x12000, scoped, tag = 'internal scratch']
  %s0 = inlined_call_operand.vmem [shape: bf16[4,10,18,128], index: 0, kind: input, shape index: {}]
  %s1 = inlined_call_operand.vmem [shape: bf16[1152,128], index: 1, kind: input, shape index: {}]
  %s2 = inlined_call_operand.vmem [shape: f32[1,128], index: 2, kind: input, shape index: {}]
  %s3 = inlined_call_operand.hbm [shape: f32[4,128,128], index: 3, kind: output, shape index: {}]
  %s4 = sld [smem:[#allocation0]]
  $region45: #{tpu_custom_call.1} parent=0
    _
  %s6 = ssub.s32 1, %s4
  %s7 = scalar_select 0, %s6, %s4
  $region1: #{tpu_custom_call.1} parent=0
    #allocation2 [shape = 'u8[131072]{0}', space=vmem, size = 0x20000, scoped, tag = 'output window, operand 0']
    #allocation3 [shape = 's32[2]{0}', space=sflag, size = 0x8, scoped, tag = 'scoped memory for tpu_custom_call.1']
    %8 = vsyncpa [#allocation3], 0
    %s9 = scalar_lea.sflag [#allocation3], 1
    %10 = vsyncpa %s9, 0
    loop: start=0, step=1, limit=6
    $region2: #{tpu_custom_call.1} parent=1 // loop_pre_header
      _
    $region3: #{tpu_custom_call.1} parent=1 // loop_header
      %s12 = sphi 0, %s16
      %p13 = scmp.ge.s32.totalorder %s12, 6
      %s22 = sphi 0, %s24
      %s25 = sphi 0, %s22
      %s26 = sphi 0, %s25
      %s42 = sphi 0, %s26
      %s46 = sphi 0, %s46
      %s48 = sphi 0, %s46
      %s49 = sphi 0, %s48
      %s63 = sphi 0, %s49
      %s67 = sphi 0, %s67
      %s69 = sphi 0, %s67
      %s70 = sphi 0, %s69
      %s84 = sphi 0, %s70
      %s90 = sphi 0, %s92
      %s93 = sphi 0, %s90
      %s94 = sphi 0, %s93
      %s110 = sphi 0, %s94
    $region4: #{tpu_custom_call.1} parent=1 // loop_header_branch
      %15 = sbr.rel (%p13) target = $region8
    $region5: #{tpu_custom_call.1} parent=1 // loop_body
      %s17 = ssub.s32 %s12, 1
      %s18 = ssub.s32 %s12, 2
      %s19 = sadd.s32 %s12, 1
      %s20 = ssub.s32 %s12, %s19
      %p21 = scmp.eq.s32.totalorder %s20, 0
      %s23 = sadd.s32 %s22, 1
      %s24 = scalar_select %p21, %s22, %s23
      %p27 = pneg %p21
      %p28 = scmp.eq.s32.totalorder %s12, 3
      %p29 = por %p27, %p28
      %p30 = scmp.ne.s32.totalorder %s22, %s25
      %p31 = scmp.eq.s32.totalorder %s12, 0
      %p32 = por %p30, %p31
      %p33 = scmp.ne.s32.totalorder %s22, %s25
      %p34 = scmp.eq.s32.totalorder %s17, 3
      %p35 = por %p33, %p34
      %p36 = scmp.ne.s32.totalorder %s25, %s26
      %p37 = scmp.eq.s32.totalorder %s17, 0
      %p38 = por %p36, %p37
      %p39 = scmp.ne.s32.totalorder %s25, %s26
      %p40 = scmp.eq.s32.totalorder %s18, 3
      %p41 = por %p39, %p40
      %p43 = scmp.ne.s32.totalorder %s26, %s42
      %p44 = scmp.eq.s32.totalorder %s18, 0
      %p45 = por %p43, %p44
      %s47 = sadd.s32 %s46, 1
      %p50 = scmp.eq.s32.totalorder %s12, 3
      %p51 = scmp.ne.s32.totalorder %s46, %s48
      %p52 = scmp.eq.s32.totalorder %s12, 0
      %p53 = por %p51, %p52
      %p54 = scmp.ne.s32.totalorder %s46, %s48
      %p55 = scmp.eq.s32.totalorder %s17, 3
      %p56 = por %p54, %p55
      %p57 = scmp.ne.s32.totalorder %s48, %s49
      %p58 = scmp.eq.s32.totalorder %s17, 0
      %p59 = por %p57, %p58
      %p60 = scmp.ne.s32.totalorder %s48, %s49
      %p61 = scmp.eq.s32.totalorder %s18, 3
      %p62 = por %p60, %p61
      %p64 = scmp.ne.s32.totalorder %s49, %s63
      %p65 = scmp.eq.s32.totalorder %s18, 0
      %p66 = por %p64, %p65
      %s68 = sadd.s32 %s67, 1
      %p71 = scmp.eq.s32.totalorder %s12, 3
      %p72 = scmp.ne.s32.totalorder %s67, %s69
      %p73 = scmp.eq.s32.totalorder %s12, 0
      %p74 = por %p72, %p73
      %p75 = scmp.ne.s32.totalorder %s67, %s69
      %p76 = scmp.eq.s32.totalorder %s17, 3
      %p77 = por %p75, %p76
      %p78 = scmp.ne.s32.totalorder %s69, %s70
      %p79 = scmp.eq.s32.totalorder %s17, 0
      %p80 = por %p78, %p79
      %p81 = scmp.ne.s32.totalorder %s69, %s70
      %p82 = scmp.eq.s32.totalorder %s18, 3
      %p83 = por %p81, %p82
      %p85 = scmp.ne.s32.totalorder %s70, %s84
      %p86 = scmp.eq.s32.totalorder %s18, 0
      %p87 = por %p85, %p86
      %s88 = ssub.s32 %s12, %s19
      %p89 = scmp.eq.s32.totalorder %s88, 0
      %s91 = sadd.s32 %s90, 1
      %s92 = scalar_select %p89, %s90, %s91
      %p95 = pneg %p89
      %p96 = scmp.eq.s32.totalorder %s12, 3
      %p97 = por %p95, %p96
      %p98 = scmp.ne.s32.totalorder %s90, %s93
      %p99 = scmp.eq.s32.totalorder %s12, 0
      %p100 = por %p98, %p99
      %p101 = scmp.ne.s32.totalorder %s90, %s93
      %p102 = scmp.eq.s32.totalorder %s17, 3
      %p103 = por %p101, %p102
      %p104 = scmp.ne.s32.totalorder %s93, %s94
      %p105 = scmp.eq.s32.totalorder %s17, 0
      %p106 = por %p104, %p105
      %p107 = scmp.ne.s32.totalorder %s93, %s94
      %p108 = scmp.eq.s32.totalorder %s18, 3
      %p109 = por %p107, %p108
      %p111 = scmp.ne.s32.totalorder %s94, %s110
      %p112 = scmp.eq.s32.totalorder %s18, 0
      %p113 = por %p111, %p112
      %p114 = scmp.le.s32.totalorder 1, %s12
      %p115 = scmp.lt.s32.totalorder %s12, 5
      %p116 = pnand %p114, %p115
      %p117 = pneg %p116
      // Predicated region
      $region9: #{tpu_custom_call.1} parent=5 // pred_check
        _
      $region10: #{tpu_custom_call.1} parent=5 // pred_check_branch
        %119 = sbr.rel (%p116) target = $region12
      $region11: #{tpu_custom_call.1} parent=5 // pred_region
        %s120 = ssub.s32 %s12, 1
        // Predicated region
        $region13: #{tpu_custom_call.1} parent=11 // pred_check
          %p121 = pneg %p59
        $region14: #{tpu_custom_call.1} parent=11 // pred_check_branch
          %123 = sbr.rel (%p121) target = $region16
        $region15: #{tpu_custom_call.1} parent=11 // pred_region
          _
        $region16: #{tpu_custom_call.1} parent=11 // pred_fallthru
          _
        // Predicated region
        $region17: #{tpu_custom_call.1} parent=11 // pred_check
          %p124 = pneg %p80
        $region18: #{tpu_custom_call.1} parent=11 // pred_check_branch
          %126 = sbr.rel (%p124) target = $region20
        $region19: #{tpu_custom_call.1} parent=11 // pred_region
          _
        $region20: #{tpu_custom_call.1} parent=11 // pred_fallthru
          _
      $region12: #{tpu_custom_call.1} parent=5 // pred_fallthru
        _
      %p127 = scmp.lt.s32.totalorder %s12, 4
      // Predicated region
      $region21: #{tpu_custom_call.1} parent=5 // pred_check
        %p128 = pneg %p127
      $region22: #{tpu_custom_call.1} parent=5 // pred_check_branch
        %130 = sbr.rel (%p128) target = $region24
      $region23: #{tpu_custom_call.1} parent=5 // pred_region
        // Predicated region
        $region25: #{tpu_custom_call.1} parent=23 // pred_check
          %p131 = pneg %p32
        $region26: #{tpu_custom_call.1} parent=23 // pred_check_branch
          %133 = sbr.rel (%p131) target = $region28
        $region27: #{tpu_custom_call.1} parent=23 // pred_region
          %p134 = scmp.lt.s32.totalorder %s12, 3
          %s135 = scalar_select %p134, %s12, 3
          %s136 = smul.addr %s135, 30
          %s137 = smul.addr %s136, 4
          %s138 = scalar_lea.vmem %s0, %s137
        $region28: #{tpu_custom_call.1} parent=23 // pred_fallthru
          _
      $region24: #{tpu_custom_call.1} parent=5 // pred_fallthru
        _
      %p139 = scmp.le.s32.totalorder 1, %s12
      %p140 = scmp.lt.s32.totalorder %s12, 5
      %p141 = pnand %p139, %p140
      %p142 = pneg %p141
      // Predicated region
      $region29: #{tpu_custom_call.1} parent=5 // pred_check
        _
      $region30: #{tpu_custom_call.1} parent=5 // pred_check_branch
        %144 = sbr.rel (%p141) target = $region32
      $region31: #{tpu_custom_call.1} parent=5 // pred_region
        %s145 = ssub.s32 %s12, 1
        %p146 = scmp.lt.s32.totalorder %s17, 3
        %s147 = scalar_select %p146, %s17, 3
        %s148 = smul.addr %s147, 30
        %s149 = smul.addr %s148, 4
        %s150 = scalar_lea.vmem %s0, %s149
        %p151 = pneg %p38
        %p152 = pneg %p35
        %p153 = pneg %p59
        %p154 = pneg %p56
        %p155 = pneg %p80
        %p156 = pneg %p77
        %p157 = pneg %p106
        %p158 = pneg %p103
        %s159 = sand.u32 %s93, 1
        %s160 = scalar_lea.sflag [#allocation3], %s159
        %s161 = sand.u32 %s93, 1
        %s162 = smul.addr %s161, 128
        %s163 = scalar_lea.vmem [#allocation2], %s162
        %p164 = scmp.lt.s32.totalorder %s17, 3
        %s165 = scalar_select %p164, %s17, 3
        %s166 = smul.addr %s165, 30
        %s167 = smul.addr %s166, 4
        %s168 = scalar_lea.vmem %s0, %s167
        %v170 = vld [vmem:[%s168] sm:$0xf]
        %v171 = vld [vmem:[%s168 + $0x4] sm:$0xf]
        %v172 = vld [vmem:[%s168 + $0x8] sm:$0x1]
        %v173 = vld [vmem:[%s168 + $0xc] sm:$0xf]
        %v174 = vld [vmem:[%s168 + $0x10] sm:$0xf]
        %v175 = vld [vmem:[%s168 + $0x14] sm:$0x1]
        %v176 = vld [vmem:[%s168 + $0x18] sm:$0xf]
        %v177 = vld [vmem:[%s168 + $0x1c] sm:$0xf]
        %v178 = vld [vmem:[%s168 + $0x20] sm:$0x1]
        %v179 = vld [vmem:[%s168 + $0x24] sm:$0xf]
        %v180 = vld [vmem:[%s168 + $0x28] sm:$0xf]
        %v181 = vld [vmem:[%s168 + $0x2c] sm:$0x1]
        %v182 = vld [vmem:[%s168 + $0x30] sm:$0xf]
        %v183 = vld [vmem:[%s168 + $0x34] sm:$0xf]
        %v184 = vld [vmem:[%s168 + $0x38] sm:$0x1]
        %v185 = vld [vmem:[%s168 + $0x3c] sm:$0xf]
        %v186 = vld [vmem:[%s168 + $0x40] sm:$0xf]
        %v187 = vld [vmem:[%s168 + $0x44] sm:$0x1]
        %v188 = vld [vmem:[%s168 + $0x48] sm:$0xf]
        %v189 = vld [vmem:[%s168 + $0x4c] sm:$0xf]
        %v190 = vld [vmem:[%s168 + $0x50] sm:$0x1]
        %v191 = vld [vmem:[%s168 + $0x54] sm:$0xf]
        %v192 = vld [vmem:[%s168 + $0x58] sm:$0xf]
        %v193 = vld [vmem:[%s168 + $0x5c] sm:$0x1]
        %v194 = vld [vmem:[%s168 + $0x60] sm:$0xf]
        %v195 = vld [vmem:[%s168 + $0x64] sm:$0xf]
        %v196 = vld [vmem:[%s168 + $0x68] sm:$0x1]
        %v197 = vld [vmem:[%s168 + $0x6c] sm:$0xf]
        %v198 = vld [vmem:[%s168 + $0x70] sm:$0xf]
        %v199 = vld [vmem:[%s168 + $0x74] sm:$0x1]
        %v216 = vunpack.c.l.b16 %v170
        %v217 = vunpack.c.l.b16 %v171
        %v218 = vunpack.c.l.b16 %v173
        %v219 = vunpack.c.l.b16 %v174
        %v220 = vunpack.c.l.b16 %v176
        %v221 = vunpack.c.l.b16 %v177
        %v222 = vunpack.c.l.b16 %v179
        %v223 = vunpack.c.l.b16 %v180
        %v224 = vunpack.c.l.b16 %v182
        %v225 = vunpack.c.l.b16 %v183
        %v226 = vunpack.c.l.b16 %v185
        %v227 = vunpack.c.l.b16 %v186
        %v228 = vunpack.c.l.b16 %v188
        %v229 = vunpack.c.l.b16 %v189
        %v230 = vunpack.c.l.b16 %v191
        %v231 = vunpack.c.l.b16 %v192
        %v232 = vpack.c.b16 %v217, %v216
        %v233 = vpack.c.b16 %v219, %v218
        %v234 = vpack.c.b16 %v221, %v220
        %v235 = vpack.c.b16 %v223, %v222
        %v236 = vpack.c.b16 %v225, %v224
        %v237 = vpack.c.b16 %v227, %v226
        %v238 = vpack.c.b16 %v229, %v228
        %v239 = vpack.c.b16 %v231, %v230
        %v256 = vunpack.c.l.b16 %v172
        %v257 = vunpack.c.l.b16 %v175
        %v258 = vunpack.c.l.b16 %v178
        %v259 = vunpack.c.l.b16 %v181
        %v260 = vunpack.c.l.b16 %v184
        %v261 = vunpack.c.l.b16 %v187
        %v262 = vunpack.c.l.b16 %v190
        %v263 = vunpack.c.l.b16 %v193
        %v264 = vpack.c.b16 %v256, %v256
        %v265 = vpack.c.b16 %v257, %v257
        %v266 = vpack.c.b16 %v258, %v258
        %v267 = vpack.c.b16 %v259, %v259
        %v268 = vpack.c.b16 %v260, %v260
        %v269 = vpack.c.b16 %v261, %v261
        %v270 = vpack.c.b16 %v262, %v262
        %v271 = vpack.c.b16 %v263, %v263
        %vm272 = vsmask.f32 7424
        %v274 = vshrl.u32 %v232, 16
        %v276 = vshll.u32 %v232, 16
        %v278 = vrot.slane %v276, 1
        %v279 = vor.u32 %v274, %v278
        %v281 = vshll.u32 %v264, 16
        %v283 = vrot.slane %v281, 1
        %v284 = vsel %vm272, %v279, %v283
        %v286 = vshrl.u32 %v233, 16
        %v288 = vshll.u32 %v233, 16
        %v290 = vrot.slane %v288, 1
        %v291 = vor.u32 %v286, %v290
        %v293 = vshll.u32 %v265, 16
        %v295 = vrot.slane %v293, 1
        %v296 = vsel %vm272, %v291, %v295
        %v298 = vshrl.u32 %v234, 16
        %v300 = vshll.u32 %v234, 16
        %v302 = vrot.slane %v300, 1
        %v303 = vor.u32 %v298, %v302
        %v305 = vshll.u32 %v266, 16
        %v307 = vrot.slane %v305, 1
        %v308 = vsel %vm272, %v303, %v307
        %v310 = vshrl.u32 %v235, 16
        %v312 = vshll.u32 %v235, 16
        %v314 = vrot.slane %v312, 1
        %v315 = vor.u32 %v310, %v314
        %v317 = vshll.u32 %v267, 16
        %v319 = vrot.slane %v317, 1
        %v320 = vsel %vm272, %v315, %v319
        %v322 = vshrl.u32 %v236, 16
        %v324 = vshll.u32 %v236, 16
        %v326 = vrot.slane %v324, 1
        %v327 = vor.u32 %v322, %v326
        %v329 = vshll.u32 %v268, 16
        %v331 = vrot.slane %v329, 1
        %v332 = vsel %vm272, %v327, %v331
        %v334 = vshrl.u32 %v237, 16
        %v336 = vshll.u32 %v237, 16
        %v338 = vrot.slane %v336, 1
        %v339 = vor.u32 %v334, %v338
        %v341 = vshll.u32 %v269, 16
        %v343 = vrot.slane %v341, 1
        %v344 = vsel %vm272, %v339, %v343
        %v346 = vshrl.u32 %v238, 16
        %v348 = vshll.u32 %v238, 16
        %v350 = vrot.slane %v348, 1
        %v351 = vor.u32 %v346, %v350
        %v353 = vshll.u32 %v270, 16
        %v355 = vrot.slane %v353, 1
        %v356 = vsel %vm272, %v351, %v355
        %v358 = vshrl.u32 %v239, 16
        %v360 = vshll.u32 %v239, 16
        %v362 = vrot.slane %v360, 1
        %v363 = vor.u32 %v358, %v362
        %v365 = vshll.u32 %v271, 16
        %v367 = vrot.slane %v365, 1
        %v368 = vsel %vm272, %v363, %v367
        %vm377 = vcmask 1046528
        %v378 = vrot.slane %v232, 1
        %v379 = vrot.slane %v264, 1
        %v380 = vsel %vm377, %v378, %v379
        %v381 = vrot.slane %v233, 1
        %v382 = vrot.slane %v265, 1
        %v383 = vsel %vm377, %v381, %v382
        %v384 = vrot.slane %v234, 1
        %v385 = vrot.slane %v266, 1
        %v386 = vsel %vm377, %v384, %v385
        %v387 = vrot.slane %v235, 1
        %v388 = vrot.slane %v267, 1
        %v389 = vsel %vm377, %v387, %v388
        %v390 = vrot.slane %v236, 1
        %v391 = vrot.slane %v268, 1
        %v392 = vsel %vm377, %v390, %v391
        %v393 = vrot.slane %v237, 1
        %v394 = vrot.slane %v269, 1
        %v395 = vsel %vm377, %v393, %v394
        %v396 = vrot.slane %v238, 1
        %v397 = vrot.slane %v270, 1
        %v398 = vsel %vm377, %v396, %v397
        %v399 = vrot.slane %v239, 1
        %v400 = vrot.slane %v271, 1
        %v401 = vsel %vm377, %v399, %v400
        %v412 = vunpack.c.l.b16 %v194
        %v413 = vunpack.c.l.b16 %v195
        %v414 = vpack.c.b16 %v413, %v412
        %v417 = vunpack.c.l.b16 %v196
        %v418 = vpack.c.b16 %v417, %v417
        %v420 = vshrl.u32 %v414, 16
        %v422 = vshll.u32 %v414, 16
        %v424 = vrot.slane %v422, 1
        %v425 = vor.u32 %v420, %v424
        %v427 = vshll.u32 %v418, 16
        %v429 = vrot.slane %v427, 1
        %v430 = vsel %vm272, %v425, %v429
        %v432 = vrot.slane %v414, 1
        %v433 = vrot.slane %v418, 1
        %v434 = vsel %vm377, %v432, %v433
        %v438 = vunpack.c.l.b16 %v197
        %v439 = vunpack.c.l.b16 %v198
        %v440 = vpack.c.b16 %v439, %v438
        %v443 = vunpack.c.l.b16 %v199
        %v444 = vpack.c.b16 %v443, %v443
        %v446 = vshrl.u32 %v440, 16
        %v448 = vshll.u32 %v440, 16
        %v450 = vrot.slane %v448, 1
        %v451 = vor.u32 %v446, %v450
        %v453 = vshll.u32 %v444, 16
        %v455 = vrot.slane %v453, 1
        %v456 = vsel %vm272, %v451, %v455
        %v458 = vrot.slane %v440, 1
        %v459 = vrot.slane %v444, 1
        %v460 = vsel %vm377, %v458, %v459
        %v462 = vld [vmem:[%s1] sm:$0xf]
        %v463 = vld [vmem:[%s1 + $0x4] sm:$0xf]
        %v464 = vld [vmem:[%s1 + $0x8] sm:$0xf]
        %v465 = vld [vmem:[%s1 + $0xc] sm:$0xf]
        %v466 = vld [vmem:[%s1 + $0x10] sm:$0xf]
        %v467 = vld [vmem:[%s1 + $0x14] sm:$0xf]
        %v468 = vld [vmem:[%s1 + $0x18] sm:$0xf]
        %v469 = vld [vmem:[%s1 + $0x1c] sm:$0xf]
        %v470 = vld [vmem:[%s1 + $0x20] sm:$0xf]
        %v471 = vld [vmem:[%s1 + $0x24] sm:$0xf]
        %v472 = vld [vmem:[%s1 + $0x28] sm:$0xf]
        %v473 = vld [vmem:[%s1 + $0x2c] sm:$0xf]
        %v474 = vld [vmem:[%s1 + $0x30] sm:$0xf]
        %v475 = vld [vmem:[%s1 + $0x34] sm:$0xf]
        %v476 = vld [vmem:[%s1 + $0x38] sm:$0xf]
        %v477 = vld [vmem:[%s1 + $0x3c] sm:$0xf]
        %v478 = vld [vmem:[%s1 + $0x40] sm:$0xf]
        %v479 = vld [vmem:[%s1 + $0x44] sm:$0xf]
        %v480 = vld [vmem:[%s1 + $0x48] sm:$0xf]
        %v481 = vld [vmem:[%s1 + $0x4c] sm:$0xf]
        %v482 = vld [vmem:[%s1 + $0x50] sm:$0xf]
        %v483 = vld [vmem:[%s1 + $0x54] sm:$0xf]
        %v484 = vld [vmem:[%s1 + $0x58] sm:$0xf]
        %v485 = vld [vmem:[%s1 + $0x5c] sm:$0xf]
        %v486 = vld [vmem:[%s1 + $0x60] sm:$0xf]
        %v487 = vld [vmem:[%s1 + $0x64] sm:$0xf]
        %v488 = vld [vmem:[%s1 + $0x68] sm:$0xf]
        %v489 = vld [vmem:[%s1 + $0x6c] sm:$0xf]
        %v490 = vld [vmem:[%s1 + $0x70] sm:$0xf]
        %v491 = vld [vmem:[%s1 + $0x74] sm:$0xf]
        %v492 = vld [vmem:[%s1 + $0x78] sm:$0xf]
        %v493 = vld [vmem:[%s1 + $0x7c] sm:$0xf]
        %v494 = vld [vmem:[%s1 + $0x80] sm:$0xf]
        %v495 = vld [vmem:[%s1 + $0x84] sm:$0xf]
        %v496 = vld [vmem:[%s1 + $0x88] sm:$0xf]
        %v497 = vld [vmem:[%s1 + $0x8c] sm:$0xf]
        %v498 = vld [vmem:[%s1 + $0x90] sm:$0xf]
        %v499 = vld [vmem:[%s1 + $0x94] sm:$0xf]
        %v500 = vld [vmem:[%s1 + $0x98] sm:$0xf]
        %v501 = vld [vmem:[%s1 + $0x9c] sm:$0xf]
        %v502 = vld [vmem:[%s1 + $0xa0] sm:$0xf]
        %v503 = vld [vmem:[%s1 + $0xa4] sm:$0xf]
        %v504 = vld [vmem:[%s1 + $0xa8] sm:$0xf]
        %v505 = vld [vmem:[%s1 + $0xac] sm:$0xf]
        %v506 = vld [vmem:[%s1 + $0xb0] sm:$0xf]
        %v507 = vld [vmem:[%s1 + $0xb4] sm:$0xf]
        %v508 = vld [vmem:[%s1 + $0xb8] sm:$0xf]
        %v509 = vld [vmem:[%s1 + $0xbc] sm:$0xf]
        %v510 = vld [vmem:[%s1 + $0xc0] sm:$0xf]
        %v511 = vld [vmem:[%s1 + $0xc4] sm:$0xf]
        %v512 = vld [vmem:[%s1 + $0xc8] sm:$0xf]
        %v513 = vld [vmem:[%s1 + $0xcc] sm:$0xf]
        %v514 = vld [vmem:[%s1 + $0xd0] sm:$0xf]
        %v515 = vld [vmem:[%s1 + $0xd4] sm:$0xf]
        %v516 = vld [vmem:[%s1 + $0xd8] sm:$0xf]
        %v517 = vld [vmem:[%s1 + $0xdc] sm:$0xf]
        %v518 = vld [vmem:[%s1 + $0xe0] sm:$0xf]
        %v519 = vld [vmem:[%s1 + $0xe4] sm:$0xf]
        %v520 = vld [vmem:[%s1 + $0xe8] sm:$0xf]
        %v521 = vld [vmem:[%s1 + $0xec] sm:$0xf]
        %v522 = vld [vmem:[%s1 + $0xf0] sm:$0xf]
        %v523 = vld [vmem:[%s1 + $0xf4] sm:$0xf]
        %v524 = vld [vmem:[%s1 + $0xf8] sm:$0xf]
        %v525 = vld [vmem:[%s1 + $0xfc] sm:$0xf]
        %v526 = vld [vmem:[%s1 + $0x100] sm:$0xf]
        %v527 = vld [vmem:[%s1 + $0x104] sm:$0xf]
        %v528 = vld [vmem:[%s1 + $0x108] sm:$0xf]
        %v529 = vld [vmem:[%s1 + $0x10c] sm:$0xf]
        %v530 = vld [vmem:[%s1 + $0x110] sm:$0xf]
        %v531 = vld [vmem:[%s1 + $0x114] sm:$0xf]
        %v532 = vld [vmem:[%s1 + $0x118] sm:$0xf]
        %v533 = vld [vmem:[%s1 + $0x11c] sm:$0xf]
        %v534 = vld [vmem:[%s1 + $0x120] sm:$0xf]
        %v535 = vld [vmem:[%s1 + $0x124] sm:$0xf]
        %v536 = vld [vmem:[%s1 + $0x128] sm:$0xf]
        %v537 = vld [vmem:[%s1 + $0x12c] sm:$0xf]
        %v538 = vld [vmem:[%s1 + $0x130] sm:$0xf]
        %v539 = vld [vmem:[%s1 + $0x134] sm:$0xf]
        %v540 = vld [vmem:[%s1 + $0x138] sm:$0xf]
        %v541 = vld [vmem:[%s1 + $0x13c] sm:$0xf]
        %v542 = vld [vmem:[%s1 + $0x140] sm:$0xf]
        %v543 = vld [vmem:[%s1 + $0x144] sm:$0xf]
        %v544 = vld [vmem:[%s1 + $0x148] sm:$0xf]
        %v545 = vld [vmem:[%s1 + $0x14c] sm:$0xf]
        %v546 = vld [vmem:[%s1 + $0x150] sm:$0xf]
        %v547 = vld [vmem:[%s1 + $0x154] sm:$0xf]
        %v548 = vld [vmem:[%s1 + $0x158] sm:$0xf]
        %v549 = vld [vmem:[%s1 + $0x15c] sm:$0xf]
        %v550 = vld [vmem:[%s1 + $0x160] sm:$0xf]
        %v551 = vld [vmem:[%s1 + $0x164] sm:$0xf]
        %v552 = vld [vmem:[%s1 + $0x168] sm:$0xf]
        %v553 = vld [vmem:[%s1 + $0x16c] sm:$0xf]
        %v554 = vld [vmem:[%s1 + $0x170] sm:$0xf]
        %v555 = vld [vmem:[%s1 + $0x174] sm:$0xf]
        %v556 = vld [vmem:[%s1 + $0x178] sm:$0xf]
        %v557 = vld [vmem:[%s1 + $0x17c] sm:$0xf]
        %v558 = vld [vmem:[%s1 + $0x180] sm:$0xf]
        %v559 = vld [vmem:[%s1 + $0x184] sm:$0xf]
        %v560 = vld [vmem:[%s1 + $0x188] sm:$0xf]
        %v561 = vld [vmem:[%s1 + $0x18c] sm:$0xf]
        %v562 = vld [vmem:[%s1 + $0x190] sm:$0xf]
        %v563 = vld [vmem:[%s1 + $0x194] sm:$0xf]
        %v564 = vld [vmem:[%s1 + $0x198] sm:$0xf]
        %v565 = vld [vmem:[%s1 + $0x19c] sm:$0xf]
        %v566 = vld [vmem:[%s1 + $0x1a0] sm:$0xf]
        %v567 = vld [vmem:[%s1 + $0x1a4] sm:$0xf]
        %v568 = vld [vmem:[%s1 + $0x1a8] sm:$0xf]
        %v569 = vld [vmem:[%s1 + $0x1ac] sm:$0xf]
        %v570 = vld [vmem:[%s1 + $0x1b0] sm:$0xf]
        %v571 = vld [vmem:[%s1 + $0x1b4] sm:$0xf]
        %v572 = vld [vmem:[%s1 + $0x1b8] sm:$0xf]
        %v573 = vld [vmem:[%s1 + $0x1bc] sm:$0xf]
        %v574 = vld [vmem:[%s1 + $0x1c0] sm:$0xf]
        %v575 = vld [vmem:[%s1 + $0x1c4] sm:$0xf]
        %v576 = vld [vmem:[%s1 + $0x1c8] sm:$0xf]
        %v577 = vld [vmem:[%s1 + $0x1cc] sm:$0xf]
        %v578 = vld [vmem:[%s1 + $0x1d0] sm:$0xf]
        %v579 = vld [vmem:[%s1 + $0x1d4] sm:$0xf]
        %v580 = vld [vmem:[%s1 + $0x1d8] sm:$0xf]
        %v581 = vld [vmem:[%s1 + $0x1dc] sm:$0xf]
        %v582 = vld [vmem:[%s1 + $0x1e0] sm:$0xf]
        %v583 = vld [vmem:[%s1 + $0x1e4] sm:$0xf]
        %v584 = vld [vmem:[%s1 + $0x1e8] sm:$0xf]
        %v585 = vld [vmem:[%s1 + $0x1ec] sm:$0xf]
        %v586 = vld [vmem:[%s1 + $0x1f0] sm:$0xf]
        %v587 = vld [vmem:[%s1 + $0x1f4] sm:$0xf]
        %v588 = vld [vmem:[%s1 + $0x1f8] sm:$0xf]
        %v589 = vld [vmem:[%s1 + $0x1fc] sm:$0xf]
        %v590 = vld [vmem:[%s1 + $0x200] sm:$0xf]
        %v591 = vld [vmem:[%s1 + $0x204] sm:$0xf]
        %v592 = vld [vmem:[%s1 + $0x208] sm:$0xf]
        %v593 = vld [vmem:[%s1 + $0x20c] sm:$0xf]
        %v594 = vld [vmem:[%s1 + $0x210] sm:$0xf]
        %v595 = vld [vmem:[%s1 + $0x214] sm:$0xf]
        %v596 = vld [vmem:[%s1 + $0x218] sm:$0xf]
        %v597 = vld [vmem:[%s1 + $0x21c] sm:$0xf]
        %v598 = vld [vmem:[%s1 + $0x220] sm:$0xf]
        %v599 = vld [vmem:[%s1 + $0x224] sm:$0xf]
        %v600 = vld [vmem:[%s1 + $0x228] sm:$0xf]
        %v601 = vld [vmem:[%s1 + $0x22c] sm:$0xf]
        %v602 = vld [vmem:[%s1 + $0x230] sm:$0xf]
        %v603 = vld [vmem:[%s1 + $0x234] sm:$0xf]
        %v604 = vld [vmem:[%s1 + $0x238] sm:$0xf]
        %v605 = vld [vmem:[%s1 + $0x23c] sm:$0xf]
        %v606 = vld [vmem:[%s2] sm:$0x1]
        %v608 = vlaneseq
        %v609 = vshrl.u32 %v608, 7
        %v610 = vsub.s32 0, %v609
        %v611 = vrot.slane %v606, %v610
        %v757 = vunpack.c.l.b16 %v462
        %v758 = vunpack.c.l.b16 %v463
        %v759 = vunpack.c.l.b16 %v464
        %v760 = vunpack.c.l.b16 %v465
        %v761 = vunpack.c.l.b16 %v466
        %v762 = vunpack.c.l.b16 %v467
        %v763 = vunpack.c.l.b16 %v468
        %v764 = vunpack.c.l.b16 %v469
        %v765 = vunpack.c.l.b16 %v470
        %v766 = vunpack.c.l.b16 %v471
        %v767 = vunpack.c.l.b16 %v472
        %v768 = vunpack.c.l.b16 %v473
        %v769 = vunpack.c.l.b16 %v474
        %v770 = vunpack.c.l.b16 %v475
        %v771 = vunpack.c.l.b16 %v476
        %v772 = vunpack.c.l.b16 %v477
        %v773 = vunpack.c.l.b16 %v478
        %v774 = vunpack.c.l.b16 %v479
        %v775 = vunpack.c.l.b16 %v480
        %v776 = vunpack.c.l.b16 %v481
        %v777 = vunpack.c.l.b16 %v482
        %v778 = vunpack.c.l.b16 %v483
        %v779 = vunpack.c.l.b16 %v484
        %v780 = vunpack.c.l.b16 %v485
        %v781 = vunpack.c.l.b16 %v486
        %v782 = vunpack.c.l.b16 %v487
        %v783 = vunpack.c.l.b16 %v488
        %v784 = vunpack.c.l.b16 %v489
        %v785 = vunpack.c.l.b16 %v490
        %v786 = vunpack.c.l.b16 %v491
        %v787 = vunpack.c.l.b16 %v492
        %v788 = vunpack.c.l.b16 %v493
        %v789 = vunpack.c.l.b16 %v494
        %v790 = vunpack.c.l.b16 %v495
        %v791 = vunpack.c.l.b16 %v496
        %v792 = vunpack.c.l.b16 %v497
        %v793 = vunpack.c.l.b16 %v498
        %v794 = vunpack.c.l.b16 %v499
        %v795 = vunpack.c.l.b16 %v500
        %v796 = vunpack.c.l.b16 %v501
        %v797 = vunpack.c.l.b16 %v502
        %v798 = vunpack.c.l.b16 %v503
        %v799 = vunpack.c.l.b16 %v504
        %v800 = vunpack.c.l.b16 %v505
        %v801 = vunpack.c.l.b16 %v506
        %v802 = vunpack.c.l.b16 %v507
        %v803 = vunpack.c.l.b16 %v508
        %v804 = vunpack.c.l.b16 %v509
        %v805 = vunpack.c.l.b16 %v510
        %v806 = vunpack.c.l.b16 %v511
        %v807 = vunpack.c.l.b16 %v512
        %v808 = vunpack.c.l.b16 %v513
        %v809 = vunpack.c.l.b16 %v514
        %v810 = vunpack.c.l.b16 %v515
        %v811 = vunpack.c.l.b16 %v516
        %v812 = vunpack.c.l.b16 %v517
        %v813 = vunpack.c.l.b16 %v518
        %v814 = vunpack.c.l.b16 %v519
        %v815 = vunpack.c.l.b16 %v520
        %v816 = vunpack.c.l.b16 %v521
        %v817 = vunpack.c.l.b16 %v522
        %v818 = vunpack.c.l.b16 %v523
        %v819 = vunpack.c.l.b16 %v524
        %v820 = vunpack.c.l.b16 %v525
        %v821 = vunpack.c.l.b16 %v526
        %v822 = vunpack.c.l.b16 %v527
        %v823 = vunpack.c.l.b16 %v528
        %v824 = vunpack.c.l.b16 %v529
        %v825 = vunpack.c.l.b16 %v530
        %v826 = vunpack.c.l.b16 %v531
        %v827 = vunpack.c.l.b16 %v532
        %v828 = vunpack.c.l.b16 %v533
        %v829 = vunpack.c.l.b16 %v534
        %v830 = vunpack.c.l.b16 %v535
        %v831 = vunpack.c.l.b16 %v536
        %v832 = vunpack.c.l.b16 %v537
        %v833 = vunpack.c.l.b16 %v538
        %v834 = vunpack.c.l.b16 %v539
        %v835 = vunpack.c.l.b16 %v540
        %v836 = vunpack.c.l.b16 %v541
        %v837 = vunpack.c.l.b16 %v542
        %v838 = vunpack.c.l.b16 %v543
        %v839 = vunpack.c.l.b16 %v544
        %v840 = vunpack.c.l.b16 %v545
        %v841 = vunpack.c.l.b16 %v546
        %v842 = vunpack.c.l.b16 %v547
        %v843 = vunpack.c.l.b16 %v548
        %v844 = vunpack.c.l.b16 %v549
        %v845 = vunpack.c.l.b16 %v550
        %v846 = vunpack.c.l.b16 %v551
        %v847 = vunpack.c.l.b16 %v552
        %v848 = vunpack.c.l.b16 %v553
        %v849 = vunpack.c.l.b16 %v554
        %v850 = vunpack.c.l.b16 %v555
        %v851 = vunpack.c.l.b16 %v556
        %v852 = vunpack.c.l.b16 %v557
        %v853 = vunpack.c.l.b16 %v558
        %v854 = vunpack.c.l.b16 %v559
        %v855 = vunpack.c.l.b16 %v560
        %v856 = vunpack.c.l.b16 %v561
        %v857 = vunpack.c.l.b16 %v562
        %v858 = vunpack.c.l.b16 %v563
        %v859 = vunpack.c.l.b16 %v564
        %v860 = vunpack.c.l.b16 %v565
        %v861 = vunpack.c.l.b16 %v566
        %v862 = vunpack.c.l.b16 %v567
        %v863 = vunpack.c.l.b16 %v568
        %v864 = vunpack.c.l.b16 %v569
        %v865 = vunpack.c.l.b16 %v570
        %v866 = vunpack.c.l.b16 %v571
        %v867 = vunpack.c.l.b16 %v572
        %v868 = vunpack.c.l.b16 %v573
        %v869 = vunpack.c.l.b16 %v574
        %v870 = vunpack.c.l.b16 %v575
        %v871 = vunpack.c.l.b16 %v576
        %v872 = vunpack.c.l.b16 %v577
        %v873 = vunpack.c.l.b16 %v578
        %v874 = vunpack.c.l.b16 %v579
        %v875 = vunpack.c.l.b16 %v580
        %v876 = vunpack.c.l.b16 %v581
        %v877 = vunpack.c.l.b16 %v582
        %v878 = vunpack.c.l.b16 %v583
        %v879 = vunpack.c.l.b16 %v584
        %v880 = vunpack.c.l.b16 %v585
        %v881 = vunpack.c.l.b16 %v586
        %v882 = vunpack.c.l.b16 %v587
        %v883 = vunpack.c.l.b16 %v588
        %v884 = vunpack.c.l.b16 %v589
        %v885 = vunpack.c.l.b16 %v590
        %v886 = vunpack.c.l.b16 %v591
        %v887 = vunpack.c.l.b16 %v592
        %v888 = vunpack.c.l.b16 %v593
        %v889 = vunpack.c.l.b16 %v594
        %v890 = vunpack.c.l.b16 %v595
        %v891 = vunpack.c.l.b16 %v596
        %v892 = vunpack.c.l.b16 %v597
        %v893 = vunpack.c.l.b16 %v598
        %v894 = vunpack.c.l.b16 %v599
        %v895 = vunpack.c.l.b16 %v600
        %v896 = vunpack.c.l.b16 %v601
        %v897 = vunpack.c.l.b16 %v602
        %v898 = vunpack.c.l.b16 %v603
        %v899 = vunpack.c.l.b16 %v604
        %v900 = vunpack.c.l.b16 %v605
        %v901 = vpack.c.b16 %v758, %v757
        %v902 = vpack.c.b16 %v760, %v759
        %v903 = vpack.c.b16 %v762, %v761
        %v904 = vpack.c.b16 %v764, %v763
        %v905 = vpack.c.b16 %v766, %v765
        %v906 = vpack.c.b16 %v768, %v767
        %v907 = vpack.c.b16 %v770, %v769
        %v908 = vpack.c.b16 %v772, %v771
        %v909 = vpack.c.b16 %v774, %v773
        %v910 = vpack.c.b16 %v776, %v775
        %v911 = vpack.c.b16 %v778, %v777
        %v912 = vpack.c.b16 %v780, %v779
        %v913 = vpack.c.b16 %v782, %v781
        %v914 = vpack.c.b16 %v784, %v783
        %v915 = vpack.c.b16 %v786, %v785
        %v916 = vpack.c.b16 %v788, %v787
        %v917 = vpack.c.b16 %v790, %v789
        %v918 = vpack.c.b16 %v792, %v791
        %v919 = vpack.c.b16 %v794, %v793
        %v920 = vpack.c.b16 %v796, %v795
        %v921 = vpack.c.b16 %v798, %v797
        %v922 = vpack.c.b16 %v800, %v799
        %v923 = vpack.c.b16 %v802, %v801
        %v924 = vpack.c.b16 %v804, %v803
        %v925 = vpack.c.b16 %v806, %v805
        %v926 = vpack.c.b16 %v808, %v807
        %v927 = vpack.c.b16 %v810, %v809
        %v928 = vpack.c.b16 %v812, %v811
        %v929 = vpack.c.b16 %v814, %v813
        %v930 = vpack.c.b16 %v816, %v815
        %v931 = vpack.c.b16 %v818, %v817
        %v932 = vpack.c.b16 %v820, %v819
        %v933 = vpack.c.b16 %v822, %v821
        %v934 = vpack.c.b16 %v824, %v823
        %v935 = vpack.c.b16 %v826, %v825
        %v936 = vpack.c.b16 %v828, %v827
        %v937 = vpack.c.b16 %v830, %v829
        %v938 = vpack.c.b16 %v832, %v831
        %v939 = vpack.c.b16 %v834, %v833
        %v940 = vpack.c.b16 %v836, %v835
        %v941 = vpack.c.b16 %v838, %v837
        %v942 = vpack.c.b16 %v840, %v839
        %v943 = vpack.c.b16 %v842, %v841
        %v944 = vpack.c.b16 %v844, %v843
        %v945 = vpack.c.b16 %v846, %v845
        %v946 = vpack.c.b16 %v848, %v847
        %v947 = vpack.c.b16 %v850, %v849
        %v948 = vpack.c.b16 %v852, %v851
        %v949 = vpack.c.b16 %v854, %v853
        %v950 = vpack.c.b16 %v856, %v855
        %v951 = vpack.c.b16 %v858, %v857
        %v952 = vpack.c.b16 %v860, %v859
        %v953 = vpack.c.b16 %v862, %v861
        %v954 = vpack.c.b16 %v864, %v863
        %v955 = vpack.c.b16 %v866, %v865
        %v956 = vpack.c.b16 %v868, %v867
        %v957 = vpack.c.b16 %v870, %v869
        %v958 = vpack.c.b16 %v872, %v871
        %v959 = vpack.c.b16 %v874, %v873
        %v960 = vpack.c.b16 %v876, %v875
        %v961 = vpack.c.b16 %v878, %v877
        %v962 = vpack.c.b16 %v880, %v879
        %v963 = vpack.c.b16 %v882, %v881
        %v964 = vpack.c.b16 %v884, %v883
        %v965 = vpack.c.b16 %v886, %v885
        %v966 = vpack.c.b16 %v888, %v887
        %v967 = vpack.c.b16 %v890, %v889
        %v968 = vpack.c.b16 %v892, %v891
        %v969 = vpack.c.b16 %v894, %v893
        %v970 = vpack.c.b16 %v896, %v895
        %v971 = vpack.c.b16 %v898, %v897
        %v972 = vpack.c.b16 %v900, %v899
        %1045 = vmatprep.subr.bf16.mxu0 0
        %1046 = vmatpush1.bf16.msra.mxu0 %v901
        %1047 = vmatprep.subr.bf16.mxu0 0
        %1048 = vmatpush1.bf16.msra.mxu0 %v902
        %1049 = vmatprep.subr.bf16.mxu0 0
        %1050 = vmatpush1.bf16.msra.mxu0 %v903
        %1051 = vmatprep.subr.bf16.mxu0 0
        %1052 = vmatpush1.bf16.msra.mxu0 %v904
        %1053 = vmatprep.subr.bf16.mxu0 0
        %1054 = vmatpush1.bf16.msra.mxu0 %v905
        %1055 = vmatprep.subr.bf16.mxu0 0
        %1056 = vmatpush1.bf16.msra.mxu0 %v906
        %1057 = vmatprep.subr.bf16.mxu0 0
        %1058 = vmatpush1.bf16.msra.mxu0 %v907
        %1059 = vmatprep.subr.bf16.mxu0 0
        %1060 = vmatpush1.bf16.msra.mxu0 %v908
        %1061 = vmatprep.subr.bf16.mxu0 0
        %1062 = vmatpush1.bf16.msra.mxu0 %v909
        %1063 = vmatprep.subr.bf16.mxu0 0
        %1064 = vmatpush1.bf16.msra.mxu0 %v910
        %1065 = vmatprep.subr.bf16.mxu0 0
        %1066 = vmatpush1.bf16.msra.mxu0 %v911
        %1067 = vmatprep.subr.bf16.mxu0 0
        %1068 = vmatpush1.bf16.msra.mxu0 %v912
        %1069 = vmatprep.subr.bf16.mxu0 0
        %1070 = vmatpush1.bf16.msra.mxu0 %v913
        %1071 = vmatprep.subr.bf16.mxu0 0
        %1072 = vmatpush1.bf16.msra.mxu0 %v914
        %1073 = vmatprep.subr.bf16.mxu0 0
        %1074 = vmatpush1.bf16.msra.mxu0 %v915
        %1075 = vmatprep.subr.bf16.mxu0 0
        %1076 = vmatpush1.bf16.msra.mxu0 %v916
        %1077 = vmatprep.mubr.bf16.mxu0 %v284
        %1078 = vmatmul.mubr.bf16.gmra.mrb[0].mxu0 %v232
        %v1079 = vpop.f32.mrb[0].mxu0
        %v1080 = vadd.f32 %v611, %v1079
        %v1081 = vpop.f32.mrb[0].mxu0
        %v1082 = vpop.f32.mrb[0].mxu0
        %v1083 = vadd.f32 %v611, %v1082
        %v1084 = vpop.f32.mrb[0].mxu0
        %1085 = vmatprep.mubr.bf16.mxu0 %v296
        %1086 = vmatmul.mubr.bf16.gmra.mrb[0].mxu0 %v233
        %v1087 = vpop.f32.mrb[0].mxu0
        %v1088 = vadd.f32 %v611, %v1087
        %v1089 = vpop.f32.mrb[0].mxu0
        %v1090 = vpop.f32.mrb[0].mxu0
        %v1091 = vadd.f32 %v611, %v1090
        %v1092 = vpop.f32.mrb[0].mxu0
        %1093 = vmatprep.mubr.bf16.mxu0 %v308
        %1094 = vmatmul.mubr.bf16.gmra.mrb[0].mxu0 %v234
        %v1095 = vpop.f32.mrb[0].mxu0
        %v1096 = vadd.f32 %v611, %v1095
        %v1097 = vpop.f32.mrb[0].mxu0
        %v1098 = vpop.f32.mrb[0].mxu0
        %v1099 = vadd.f32 %v611, %v1098
        %v1100 = vpop.f32.mrb[0].mxu0
        %1101 = vmatprep.mubr.bf16.mxu0 %v320
        %1102 = vmatmul.mubr.bf16.gmra.mrb[0].mxu0 %v235
        %v1103 = vpop.f32.mrb[0].mxu0
        %v1104 = vadd.f32 %v611, %v1103
        %v1105 = vpop.f32.mrb[0].mxu0
        %v1106 = vpop.f32.mrb[0].mxu0
        %v1107 = vadd.f32 %v611, %v1106
        %v1108 = vpop.f32.mrb[0].mxu0
        %1109 = vmatprep.mubr.bf16.mxu0 %v332
        %1110 = vmatmul.mubr.bf16.gmra.mrb[0].mxu0 %v236
        %v1111 = vpop.f32.mrb[0].mxu0
        %v1112 = vadd.f32 %v611, %v1111
        %v1113 = vpop.f32.mrb[0].mxu0
        %v1114 = vpop.f32.mrb[0].mxu0
        %v1115 = vadd.f32 %v611, %v1114
        %v1116 = vpop.f32.mrb[0].mxu0
        %1117 = vmatprep.mubr.bf16.mxu0 %v344
        %1118 = vmatmul.mubr.bf16.gmra.mrb[0].mxu0 %v237
        %v1119 = vpop.f32.mrb[0].mxu0
        %v1120 = vadd.f32 %v611, %v1119
        %v1121 = vpop.f32.mrb[0].mxu0
        %v1122 = vpop.f32.mrb[0].mxu0
        %v1123 = vadd.f32 %v611, %v1122
        %v1124 = vpop.f32.mrb[0].mxu0
        %1125 = vmatprep.mubr.bf16.mxu0 %v356
        %1126 = vmatmul.mubr.bf16.gmra.mrb[0].mxu0 %v238
        %v1127 = vpop.f32.mrb[0].mxu0
        %v1128 = vadd.f32 %v611, %v1127
        %v1129 = vpop.f32.mrb[0].mxu0
        %v1130 = vpop.f32.mrb[0].mxu0
        %v1131 = vadd.f32 %v611, %v1130
        %v1132 = vpop.f32.mrb[0].mxu0
        %1133 = vmatprep.mubr.bf16.mxu0 %v368
        %1134 = vmatmul.mubr.bf16.gmra.mrb[0].mxu0 %v239
        %v1135 = vpop.f32.mrb[0].mxu0
        %v1136 = vadd.f32 %v611, %v1135
        %v1137 = vpop.f32.mrb[0].mxu0
        %v1138 = vpop.f32.mrb[0].mxu0
        %v1139 = vadd.f32 %v611, %v1138
        %v1140 = vpop.f32.mrb[0].mxu0
        %1141 = vdwg.mxu0
        %1142 = vmatprep.subr.bf16.mxu0 0
        %1143 = vmatpush1.bf16.msra.mxu0 %v917
        %1144 = vmatprep.subr.bf16.mxu0 0
        %1145 = vmatpush1.bf16.msra.mxu0 %v918
        %1146 = vmatprep.subr.bf16.mxu0 0
        %1147 = vmatpush1.bf16.msra.mxu0 %v919
        %1148 = vmatprep.subr.bf16.mxu0 0
        %1149 = vmatpush1.bf16.msra.mxu0 %v920
        %1150 = vmatprep.subr.bf16.mxu0 0
        %1151 = vmatpush1.bf16.msra.mxu0 %v921
        %1152 = vmatprep.subr.bf16.mxu0 0
        %1153 = vmatpush1.bf16.msra.mxu0 %v922
        %1154 = vmatprep.subr.bf16.mxu0 0
        %1155 = vmatpush1.bf16.msra.mxu0 %v923
        %1156 = vmatprep.subr.bf16.mxu0 0
        %1157 = vmatpush1.bf16.msra.mxu0 %v924
        %1158 = vmatprep.subr.bf16.mxu0 0
        %1159 = vmatpush1.bf16.msra.mxu0 %v925
        %1160 = vmatprep.subr.bf16.mxu0 0
        %1161 = vmatpush1.bf16.msra.mxu0 %v926
        %1162 = vmatprep.subr.bf16.mxu0 0
        %1163 = vmatpush1.bf16.msra.mxu0 %v927
        %1164 = vmatprep.subr.bf16.mxu0 0
        %1165 = vmatpush1.bf16.msra.mxu0 %v928
        %1166 = vmatprep.subr.bf16.mxu0 0
        %1167 = vmatpush1.bf16.msra.mxu0 %v929
        %1168 = vmatprep.subr.bf16.mxu0 0
        %1169 = vmatpush1.bf16.msra.mxu0 %v930
        %1170 = vmatprep.subr.bf16.mxu0 0
        %1171 = vmatpush1.bf16.msra.mxu0 %v931
        %1172 = vmatprep.subr.bf16.mxu0 0
        %1173 = vmatpush1.bf16.msra.mxu0 %v932
        %1174 = vmatprep.mubr.bf16.mxu0 %v233
        %1175 = vmatmul.mubr.bf16.gmra.mrb[0].mxu0 %v380
        %v1176 = vpop.f32.mrb[0].mxu0
        %v1177 = vadd.f32 %v1080, %v1176
        %v1178 = vpop.f32.mrb[0].mxu0
        %v1179 = vpop.f32.mrb[0].mxu0
        %v1180 = vadd.f32 %v1083, %v1179
        %v1181 = vpop.f32.mrb[0].mxu0
        %1182 = vmatprep.mubr.bf16.mxu0 %v234
        %1183 = vmatmul.mubr.bf16.gmra.mrb[0].mxu0 %v383
        %v1184 = vpop.f32.mrb[0].mxu0
        %v1185 = vadd.f32 %v1088, %v1184
        %v1186 = vpop.f32.mrb[0].mxu0
        %v1187 = vpop.f32.mrb[0].mxu0
        %v1188 = vadd.f32 %v1091, %v1187
        %v1189 = vpop.f32.mrb[0].mxu0
        %1190 = vmatprep.mubr.bf16.mxu0 %v235
        %1191 = vmatmul.mubr.bf16.gmra.mrb[0].mxu0 %v386
        %v1192 = vpop.f32.mrb[0].mxu0
        %v1193 = vadd.f32 %v1096, %v1192
        %v1194 = vpop.f32.mrb[0].mxu0
        %v1195 = vpop.f32.mrb[0].mxu0
        %v1196 = vadd.f32 %v1099, %v1195
        %v1197 = vpop.f32.mrb[0].mxu0
        %1198 = vmatprep.mubr.bf16.mxu0 %v236
        %1199 = vmatmul.mubr.bf16.gmra.mrb[0].mxu0 %v389
        %v1200 = vpop.f32.mrb[0].mxu0
        %v1201 = vadd.f32 %v1104, %v1200
        %v1202 = vpop.f32.mrb[0].mxu0
        %v1203 = vpop.f32.mrb[0].mxu0
        %v1204 = vadd.f32 %v1107, %v1203
        %v1205 = vpop.f32.mrb[0].mxu0
        %1206 = vmatprep.mubr.bf16.mxu0 %v237
        %1207 = vmatmul.mubr.bf16.gmra.mrb[0].mxu0 %v392
        %v1208 = vpop.f32.mrb[0].mxu0
        %v1209 = vadd.f32 %v1112, %v1208
        %v1210 = vpop.f32.mrb[0].mxu0
        %v1211 = vpop.f32.mrb[0].mxu0
        %v1212 = vadd.f32 %v1115, %v1211
        %v1213 = vpop.f32.mrb[0].mxu0
        %1214 = vmatprep.mubr.bf16.mxu0 %v238
        %1215 = vmatmul.mubr.bf16.gmra.mrb[0].mxu0 %v395
        %v1216 = vpop.f32.mrb[0].mxu0
        %v1217 = vadd.f32 %v1120, %v1216
        %v1218 = vpop.f32.mrb[0].mxu0
        %v1219 = vpop.f32.mrb[0].mxu0
        %v1220 = vadd.f32 %v1123, %v1219
        %v1221 = vpop.f32.mrb[0].mxu0
        %1222 = vmatprep.mubr.bf16.mxu0 %v239
        %1223 = vmatmul.mubr.bf16.gmra.mrb[0].mxu0 %v398
        %v1224 = vpop.f32.mrb[0].mxu0
        %v1225 = vadd.f32 %v1128, %v1224
        %v1226 = vpop.f32.mrb[0].mxu0
        %v1227 = vpop.f32.mrb[0].mxu0
        %v1228 = vadd.f32 %v1131, %v1227
        %v1229 = vpop.f32.mrb[0].mxu0
        %1230 = vmatprep.mubr.bf16.mxu0 %v414
        %1231 = vmatmul.mubr.bf16.gmra.mrb[0].mxu0 %v401
        %v1232 = vpop.f32.mrb[0].mxu0
        %v1233 = vadd.f32 %v1136, %v1232
        %v1234 = vpop.f32.mrb[0].mxu0
        %v1235 = vpop.f32.mrb[0].mxu0
        %v1236 = vadd.f32 %v1139, %v1235
        %v1237 = vpop.f32.mrb[0].mxu0
        %1238 = vdwg.mxu0
        %1239 = vmatprep.subr.bf16.mxu0 0
        %1240 = vmatpush1.bf16.msra.mxu0 %v933
        %1241 = vmatprep.subr.bf16.mxu0 0
        %1242 = vmatpush1.bf16.msra.mxu0 %v934
        %1243 = vmatprep.subr.bf16.mxu0 0
        %1244 = vmatpush1.bf16.msra.mxu0 %v935
        %1245 = vmatprep.subr.bf16.mxu0 0
        %1246 = vmatpush1.bf16.msra.mxu0 %v936
        %1247 = vmatprep.subr.bf16.mxu0 0
        %1248 = vmatpush1.bf16.msra.mxu0 %v937
        %1249 = vmatprep.subr.bf16.mxu0 0
        %1250 = vmatpush1.bf16.msra.mxu0 %v938
        %1251 = vmatprep.subr.bf16.mxu0 0
        %1252 = vmatpush1.bf16.msra.mxu0 %v939
        %1253 = vmatprep.subr.bf16.mxu0 0
        %1254 = vmatpush1.bf16.msra.mxu0 %v940
        %1255 = vmatprep.subr.bf16.mxu0 0
        %1256 = vmatpush1.bf16.msra.mxu0 %v941
        %1257 = vmatprep.subr.bf16.mxu0 0
        %1258 = vmatpush1.bf16.msra.mxu0 %v942
        %1259 = vmatprep.subr.bf16.mxu0 0
        %1260 = vmatpush1.bf16.msra.mxu0 %v943
        %1261 = vmatprep.subr.bf16.mxu0 0
        %1262 = vmatpush1.bf16.msra.mxu0 %v944
        %1263 = vmatprep.subr.bf16.mxu0 0
        %1264 = vmatpush1.bf16.msra.mxu0 %v945
        %1265 = vmatprep.subr.bf16.mxu0 0
        %1266 = vmatpush1.bf16.msra.mxu0 %v946
        %1267 = vmatprep.subr.bf16.mxu0 0
        %1268 = vmatpush1.bf16.msra.mxu0 %v947
        %1269 = vmatprep.subr.bf16.mxu0 0
        %1270 = vmatpush1.bf16.msra.mxu0 %v948
        %1271 = vmatprep.mubr.bf16.mxu0 %v383
        %1272 = vmatmul.mubr.bf16.gmra.mrb[0].mxu0 %v296
        %v1273 = vpop.f32.mrb[0].mxu0
        %v1274 = vadd.f32 %v1177, %v1273
        %v1275 = vpop.f32.mrb[0].mxu0
        %v1276 = vpop.f32.mrb[0].mxu0
        %v1277 = vadd.f32 %v1180, %v1276
        %v1278 = vpop.f32.mrb[0].mxu0
        %1279 = vmatprep.mubr.bf16.mxu0 %v386
        %1280 = vmatmul.mubr.bf16.gmra.mrb[0].mxu0 %v308
        %v1281 = vpop.f32.mrb[0].mxu0
        %v1282 = vadd.f32 %v1185, %v1281
        %v1283 = vpop.f32.mrb[0].mxu0
        %v1284 = vpop.f32.mrb[0].mxu0
        %v1285 = vadd.f32 %v1188, %v1284
        %v1286 = vpop.f32.mrb[0].mxu0
        %1287 = vmatprep.mubr.bf16.mxu0 %v389
        %1288 = vmatmul.mubr.bf16.gmra.mrb[0].mxu0 %v320
        %v1289 = vpop.f32.mrb[0].mxu0
        %v1290 = vadd.f32 %v1193, %v1289
        %v1291 = vpop.f32.mrb[0].mxu0
        %v1292 = vpop.f32.mrb[0].mxu0
        %v1293 = vadd.f32 %v1196, %v1292
        %v1294 = vpop.f32.mrb[0].mxu0
        %1295 = vmatprep.mubr.bf16.mxu0 %v392
        %1296 = vmatmul.mubr.bf16.gmra.mrb[0].mxu0 %v332
        %v1297 = vpop.f32.mrb[0].mxu0
        %v1298 = vadd.f32 %v1201, %v1297
        %v1299 = vpop.f32.mrb[0].mxu0
        %v1300 = vpop.f32.mrb[0].mxu0
        %v1301 = vadd.f32 %v1204, %v1300
        %v1302 = vpop.f32.mrb[0].mxu0
        %1303 = vmatprep.mubr.bf16.mxu0 %v395
        %1304 = vmatmul.mubr.bf16.gmra.mrb[0].mxu0 %v344
        %v1305 = vpop.f32.mrb[0].mxu0
        %v1306 = vadd.f32 %v1209, %v1305
        %v1307 = vpop.f32.mrb[0].mxu0
        %v1308 = vpop.f32.mrb[0].mxu0
        %v1309 = vadd.f32 %v1212, %v1308
        %v1310 = vpop.f32.mrb[0].mxu0
        %1311 = vmatprep.mubr.bf16.mxu0 %v398
        %1312 = vmatmul.mubr.bf16.gmra.mrb[0].mxu0 %v356
        %v1313 = vpop.f32.mrb[0].mxu0
        %v1314 = vadd.f32 %v1217, %v1313
        %v1315 = vpop.f32.mrb[0].mxu0
        %v1316 = vpop.f32.mrb[0].mxu0
        %v1317 = vadd.f32 %v1220, %v1316
        %v1318 = vpop.f32.mrb[0].mxu0
        %1319 = vmatprep.mubr.bf16.mxu0 %v401
        %1320 = vmatmul.mubr.bf16.gmra.mrb[0].mxu0 %v368
        %v1321 = vpop.f32.mrb[0].mxu0
        %v1322 = vadd.f32 %v1225, %v1321
        %v1323 = vpop.f32.mrb[0].mxu0
        %v1324 = vpop.f32.mrb[0].mxu0
        %v1325 = vadd.f32 %v1228, %v1324
        %v1326 = vpop.f32.mrb[0].mxu0
        %1327 = vmatprep.mubr.bf16.mxu0 %v434
        %1328 = vmatmul.mubr.bf16.gmra.mrb[0].mxu0 %v430
        %v1329 = vpop.f32.mrb[0].mxu0
        %v1330 = vadd.f32 %v1233, %v1329
        %v1331 = vpop.f32.mrb[0].mxu0
        %v1332 = vpop.f32.mrb[0].mxu0
        %v1333 = vadd.f32 %v1236, %v1332
        %v1334 = vpop.f32.mrb[0].mxu0
        %1335 = vdwg.mxu0
        %1336 = vmatprep.subr.bf16.mxu0 0
        %1337 = vmatpush1.bf16.msra.mxu0 %v949
        %1338 = vmatprep.subr.bf16.mxu0 0
        %1339 = vmatpush1.bf16.msra.mxu0 %v950
        %1340 = vmatprep.subr.bf16.mxu0 0
        %1341 = vmatpush1.bf16.msra.mxu0 %v951
        %1342 = vmatprep.subr.bf16.mxu0 0
        %1343 = vmatpush1.bf16.msra.mxu0 %v952
        %1344 = vmatprep.subr.bf16.mxu0 0
        %1345 = vmatpush1.bf16.msra.mxu0 %v953
        %1346 = vmatprep.subr.bf16.mxu0 0
        %1347 = vmatpush1.bf16.msra.mxu0 %v954
        %1348 = vmatprep.subr.bf16.mxu0 0
        %1349 = vmatpush1.bf16.msra.mxu0 %v955
        %1350 = vmatprep.subr.bf16.mxu0 0
        %1351 = vmatpush1.bf16.msra.mxu0 %v956
        %1352 = vmatprep.subr.bf16.mxu0 0
        %1353 = vmatpush1.bf16.msra.mxu0 %v957
        %1354 = vmatprep.subr.bf16.mxu0 0
        %1355 = vmatpush1.bf16.msra.mxu0 %v958
        %1356 = vmatprep.subr.bf16.mxu0 0
        %1357 = vmatpush1.bf16.msra.mxu0 %v959
        %1358 = vmatprep.subr.bf16.mxu0 0
        %1359 = vmatpush1.bf16.msra.mxu0 %v960
        %1360 = vmatprep.subr.bf16.mxu0 0
        %1361 = vmatpush1.bf16.msra.mxu0 %v961
        %1362 = vmatprep.subr.bf16.mxu0 0
        %1363 = vmatpush1.bf16.msra.mxu0 %v962
        %1364 = vmatprep.subr.bf16.mxu0 0
        %1365 = vmatpush1.bf16.msra.mxu0 %v963
        %1366 = vmatprep.subr.bf16.mxu0 0
        %1367 = vmatpush1.bf16.msra.mxu0 %v964
        %1368 = vmatprep.mubr.bf16.mxu0 %v308
        %1369 = vmatmul.mubr.bf16.gmra.mrb[0].mxu0 %v234
        %v1370 = vpop.f32.mrb[0].mxu0
        %v1371 = vadd.f32 %v1274, %v1370
        %v1372 = vpop.f32.mrb[0].mxu0
        %v1373 = vpop.f32.mrb[0].mxu0
        %v1374 = vadd.f32 %v1277, %v1373
        %v1375 = vpop.f32.mrb[0].mxu0
        %1376 = vmatprep.mubr.bf16.mxu0 %v320
        %1377 = vmatmul.mubr.bf16.gmra.mrb[0].mxu0 %v235
        %v1378 = vpop.f32.mrb[0].mxu0
        %v1379 = vadd.f32 %v1282, %v1378
        %v1380 = vpop.f32.mrb[0].mxu0
        %v1381 = vpop.f32.mrb[0].mxu0
        %v1382 = vadd.f32 %v1285, %v1381
        %v1383 = vpop.f32.mrb[0].mxu0
        %1384 = vmatprep.mubr.bf16.mxu0 %v332
        %1385 = vmatmul.mubr.bf16.gmra.mrb[0].mxu0 %v236
        %v1386 = vpop.f32.mrb[0].mxu0
        %v1387 = vadd.f32 %v1290, %v1386
        %v1388 = vpop.f32.mrb[0].mxu0
        %v1389 = vpop.f32.mrb[0].mxu0
        %v1390 = vadd.f32 %v1293, %v1389
        %v1391 = vpop.f32.mrb[0].mxu0
        %1392 = vmatprep.mubr.bf16.mxu0 %v344
        %1393 = vmatmul.mubr.bf16.gmra.mrb[0].mxu0 %v237
        %v1394 = vpop.f32.mrb[0].mxu0
        %v1395 = vadd.f32 %v1298, %v1394
        %v1396 = vpop.f32.mrb[0].mxu0
        %v1397 = vpop.f32.mrb[0].mxu0
        %v1398 = vadd.f32 %v1301, %v1397
        %v1399 = vpop.f32.mrb[0].mxu0
        %1400 = vmatprep.mubr.bf16.mxu0 %v356
        %1401 = vmatmul.mubr.bf16.gmra.mrb[0].mxu0 %v238
        %v1402 = vpop.f32.mrb[0].mxu0
        %v1403 = vadd.f32 %v1306, %v1402
        %v1404 = vpop.f32.mrb[0].mxu0
        %v1405 = vpop.f32.mrb[0].mxu0
        %v1406 = vadd.f32 %v1309, %v1405
        %v1407 = vpop.f32.mrb[0].mxu0
        %1408 = vmatprep.mubr.bf16.mxu0 %v368
        %1409 = vmatmul.mubr.bf16.gmra.mrb[0].mxu0 %v239
        %v1410 = vpop.f32.mrb[0].mxu0
        %v1411 = vadd.f32 %v1314, %v1410
        %v1412 = vpop.f32.mrb[0].mxu0
        %v1413 = vpop.f32.mrb[0].mxu0
        %v1414 = vadd.f32 %v1317, %v1413
        %v1415 = vpop.f32.mrb[0].mxu0
        %1416 = vmatprep.mubr.bf16.mxu0 %v430
        %1417 = vmatmul.mubr.bf16.gmra.mrb[0].mxu0 %v414
        %v1418 = vpop.f32.mrb[0].mxu0
        %v1419 = vadd.f32 %v1322, %v1418
        %v1420 = vpop.f32.mrb[0].mxu0
        %v1421 = vpop.f32.mrb[0].mxu0
        %v1422 = vadd.f32 %v1325, %v1421
        %v1423 = vpop.f32.mrb[0].mxu0
        %1424 = vmatprep.mubr.bf16.mxu0 %v456
        %1425 = vmatmul.mubr.bf16.gmra.mrb[0].mxu0 %v440
        %v1426 = vpop.f32.mrb[0].mxu0
        %v1427 = vadd.f32 %v1330, %v1426
        %v1428 = vpop.f32.mrb[0].mxu0
        %v1429 = vpop.f32.mrb[0].mxu0
        %v1430 = vadd.f32 %v1333, %v1429
        %v1431 = vpop.f32.mrb[0].mxu0
        %1432 = vdwg.mxu0
        %1433 = vmatprep.subr.bf16.mxu0 0
        %1434 = vmatpush1.bf16.msra.mxu0 %v965
        %1435 = vmatprep.subr.bf16.mxu0 0
        %1436 = vmatpush1.bf16.msra.mxu0 %v966
        %1437 = vmatprep.subr.bf16.mxu0 0
        %1438 = vmatpush1.bf16.msra.mxu0 %v967
        %1439 = vmatprep.subr.bf16.mxu0 0
        %1440 = vmatpush1.bf16.msra.mxu0 %v968
        %1441 = vmatprep.subr.bf16.mxu0 0
        %1442 = vmatpush1.bf16.msra.mxu0 %v969
        %1443 = vmatprep.subr.bf16.mxu0 0
        %1444 = vmatpush1.bf16.msra.mxu0 %v970
        %1445 = vmatprep.subr.bf16.mxu0 0
        %1446 = vmatpush1.bf16.msra.mxu0 %v971
        %1447 = vmatprep.subr.bf16.mxu0 0
        %1448 = vmatpush1.bf16.msra.mxu0 %v972
        %1449 = vmatprep.subr.bf16.mxu0 0
        %1450 = vmatpush1.bf16.msra.mxu0 0
        %1451 = vmatprep.subr.bf16.mxu0 0
        %1452 = vmatpush1.bf16.msra.mxu0 0
        %1453 = vmatprep.subr.bf16.mxu0 0
        %1454 = vmatpush1.bf16.msra.mxu0 0
        %1455 = vmatprep.subr.bf16.mxu0 0
        %1456 = vmatpush1.bf16.msra.mxu0 0
        %1457 = vmatprep.subr.bf16.mxu0 0
        %1458 = vmatpush1.bf16.msra.mxu0 0
        %1459 = vmatprep.subr.bf16.mxu0 0
        %1460 = vmatpush1.bf16.msra.mxu0 0
        %1461 = vmatprep.subr.bf16.mxu0 0
        %1462 = vmatpush1.bf16.msra.mxu0 0
        %1463 = vmatprep.subr.bf16.mxu0 0
        %1464 = vmatpush1.bf16.msra.mxu0 0
        %1465 = vmatprep.mubr.bf16.mxu0 0
        %1466 = vmatmul.mubr.bf16.gmra.mrb[0].mxu0 %v386
        %v1467 = vpop.f32.mrb[0].mxu0
        %v1468 = vadd.f32 %v1371, %v1467
        %v1469 = vpop.f32.mrb[0].mxu0
        %v1470 = vpop.f32.mrb[0].mxu0
        %v1471 = vadd.f32 %v1374, %v1470
        %v1472 = vpop.f32.mrb[0].mxu0
        %1473 = vmatprep.mubr.bf16.mxu0 0
        %1474 = vmatmul.mubr.bf16.gmra.mrb[0].mxu0 %v389
        %v1475 = vpop.f32.mrb[0].mxu0
        %v1476 = vadd.f32 %v1379, %v1475
        %v1477 = vpop.f32.mrb[0].mxu0
        %v1478 = vpop.f32.mrb[0].mxu0
        %v1479 = vadd.f32 %v1382, %v1478
        %v1480 = vpop.f32.mrb[0].mxu0
        %1481 = vmatprep.mubr.bf16.mxu0 0
        %1482 = vmatmul.mubr.bf16.gmra.mrb[0].mxu0 %v392
        %v1483 = vpop.f32.mrb[0].mxu0
        %v1484 = vadd.f32 %v1387, %v1483
        %v1485 = vpop.f32.mrb[0].mxu0
        %v1486 = vpop.f32.mrb[0].mxu0
        %v1487 = vadd.f32 %v1390, %v1486
        %v1488 = vpop.f32.mrb[0].mxu0
        %1489 = vmatprep.mubr.bf16.mxu0 0
        %1490 = vmatmul.mubr.bf16.gmra.mrb[0].mxu0 %v395
        %v1491 = vpop.f32.mrb[0].mxu0
        %v1492 = vadd.f32 %v1395, %v1491
        %v1493 = vpop.f32.mrb[0].mxu0
        %v1494 = vpop.f32.mrb[0].mxu0
        %v1495 = vadd.f32 %v1398, %v1494
        %v1496 = vpop.f32.mrb[0].mxu0
        %1497 = vmatprep.mubr.bf16.mxu0 0
        %1498 = vmatmul.mubr.bf16.gmra.mrb[0].mxu0 %v398
        %v1499 = vpop.f32.mrb[0].mxu0
        %v1500 = vadd.f32 %v1403, %v1499
        %v1501 = vpop.f32.mrb[0].mxu0
        %v1502 = vpop.f32.mrb[0].mxu0
        %v1503 = vadd.f32 %v1406, %v1502
        %v1504 = vpop.f32.mrb[0].mxu0
        %1505 = vmatprep.mubr.bf16.mxu0 0
        %1506 = vmatmul.mubr.bf16.gmra.mrb[0].mxu0 %v401
        %v1507 = vpop.f32.mrb[0].mxu0
        %v1508 = vadd.f32 %v1411, %v1507
        %v1509 = vpop.f32.mrb[0].mxu0
        %v1510 = vpop.f32.mrb[0].mxu0
        %v1511 = vadd.f32 %v1414, %v1510
        %v1512 = vpop.f32.mrb[0].mxu0
        %1513 = vmatprep.mubr.bf16.mxu0 0
        %1514 = vmatmul.mubr.bf16.gmra.mrb[0].mxu0 %v434
        %v1515 = vpop.f32.mrb[0].mxu0
        %v1516 = vadd.f32 %v1419, %v1515
        %v1517 = vpop.f32.mrb[0].mxu0
        %v1518 = vpop.f32.mrb[0].mxu0
        %v1519 = vadd.f32 %v1422, %v1518
        %v1520 = vpop.f32.mrb[0].mxu0
        %1521 = vmatprep.mubr.bf16.mxu0 0
        %1522 = vmatmul.mubr.bf16.gmra.mrb[0].mxu0 %v460
        %v1523 = vpop.f32.mrb[0].mxu0
        %v1524 = vadd.f32 %v1427, %v1523
        %v1525 = vpop.f32.mrb[0].mxu0
        %v1526 = vpop.f32.mrb[0].mxu0
        %v1527 = vadd.f32 %v1430, %v1526
        %v1528 = vpop.f32.mrb[0].mxu0
        %1529 = vdwg.mxu0
        %1530 = vrot.lane.b32.xlu0 %v1468, 3
        %v1531 = vpop.permute.xlu0 %1530
        %1532 = vrot.lane.b32.xlu0 %v1471, 3
        %v1533 = vpop.permute.xlu0 %1532
        %1534 = vrot.lane.b32.xlu0 %v1476, 3
        %v1535 = vpop.permute.xlu0 %1534
        %1536 = vrot.lane.b32.xlu0 %v1479, 3
        %v1537 = vpop.permute.xlu0 %1536
        %1538 = vrot.lane.b32.xlu0 %v1484, 3
        %v1539 = vpop.permute.xlu0 %1538
        %1540 = vrot.lane.b32.xlu0 %v1487, 3
        %v1541 = vpop.permute.xlu0 %1540
        %1542 = vrot.lane.b32.xlu0 %v1492, 3
        %v1543 = vpop.permute.xlu0 %1542
        %1544 = vrot.lane.b32.xlu0 %v1495, 3
        %v1545 = vpop.permute.xlu0 %1544
        %1546 = vrot.lane.b32.xlu0 %v1500, 3
        %v1547 = vpop.permute.xlu0 %1546
        %1548 = vrot.lane.b32.xlu0 %v1503, 3
        %v1549 = vpop.permute.xlu0 %1548
        %1550 = vrot.lane.b32.xlu0 %v1508, 3
        %v1551 = vpop.permute.xlu0 %1550
        %1552 = vrot.lane.b32.xlu0 %v1511, 3
        %v1553 = vpop.permute.xlu0 %1552
        %1554 = vrot.lane.b32.xlu0 %v1516, 3
        %v1555 = vpop.permute.xlu0 %1554
        %1556 = vrot.lane.b32.xlu0 %v1519, 3
        %v1557 = vpop.permute.xlu0 %1556
        %1558 = vrot.lane.b32.xlu0 %v1524, 3
        %v1559 = vpop.permute.xlu0 %1558
        %1560 = vrot.lane.b32.xlu0 %v1527, 3
        %v1561 = vpop.permute.xlu0 %1560
        %1562 = vrot.lane.b32.xlu0 %v1468, 125
        %v1563 = vpop.permute.xlu0 %1562
        %1564 = vrot.lane.b32.xlu0 %v1471, 125
        %v1565 = vpop.permute.xlu0 %1564
        %1566 = vrot.lane.b32.xlu0 %v1476, 125
        %v1567 = vpop.permute.xlu0 %1566
        %1568 = vrot.lane.b32.xlu0 %v1479, 125
        %v1569 = vpop.permute.xlu0 %1568
        %1570 = vrot.lane.b32.xlu0 %v1484, 125
        %v1571 = vpop.permute.xlu0 %1570
        %1572 = vrot.lane.b32.xlu0 %v1487, 125
        %v1573 = vpop.permute.xlu0 %1572
        %1574 = vrot.lane.b32.xlu0 %v1492, 125
        %v1575 = vpop.permute.xlu0 %1574
        %1576 = vrot.lane.b32.xlu0 %v1495, 125
        %v1577 = vpop.permute.xlu0 %1576
        %1578 = vrot.lane.b32.xlu0 %v1500, 125
        %v1579 = vpop.permute.xlu0 %1578
        %1580 = vrot.lane.b32.xlu0 %v1503, 125
        %v1581 = vpop.permute.xlu0 %1580
        %1582 = vrot.lane.b32.xlu0 %v1508, 125
        %v1583 = vpop.permute.xlu0 %1582
        %1584 = vrot.lane.b32.xlu0 %v1511, 125
        %v1585 = vpop.permute.xlu0 %1584
        %1586 = vrot.lane.b32.xlu0 %v1516, 125
        %v1587 = vpop.permute.xlu0 %1586
        %1588 = vrot.lane.b32.xlu0 %v1519, 125
        %v1589 = vpop.permute.xlu0 %1588
        %1590 = vrot.lane.b32.xlu0 %v1524, 125
        %v1591 = vpop.permute.xlu0 %1590
        %1592 = vrot.lane.b32.xlu0 %v1527, 125
        %v1593 = vpop.permute.xlu0 %1592
        %v1594 = vadd.f32 %v1531, %v1563
        %v1595 = vadd.f32 %v1533, %v1565
        %v1596 = vadd.f32 %v1535, %v1567
        %v1597 = vadd.f32 %v1537, %v1569
        %v1598 = vadd.f32 %v1539, %v1571
        %v1599 = vadd.f32 %v1541, %v1573
        %v1600 = vadd.f32 %v1543, %v1575
        %v1601 = vadd.f32 %v1545, %v1577
        %v1602 = vadd.f32 %v1547, %v1579
        %v1603 = vadd.f32 %v1549, %v1581
        %v1604 = vadd.f32 %v1551, %v1583
        %v1605 = vadd.f32 %v1553, %v1585
        %v1606 = vadd.f32 %v1555, %v1587
        %v1607 = vadd.f32 %v1557, %v1589
        %v1608 = vadd.f32 %v1559, %v1591
        %v1609 = vadd.f32 %v1561, %v1593
        %v1610 = vmax.f32 %v1468, %v1594
        %v1611 = vmax.f32 %v1471, %v1595
        %v1612 = vmax.f32 %v1476, %v1596
        %v1613 = vmax.f32 %v1479, %v1597
        %v1614 = vmax.f32 %v1484, %v1598
        %v1615 = vmax.f32 %v1487, %v1599
        %v1616 = vmax.f32 %v1492, %v1600
        %v1617 = vmax.f32 %v1495, %v1601
        %v1618 = vmax.f32 %v1500, %v1602
        %v1619 = vmax.f32 %v1503, %v1603
        %v1620 = vmax.f32 %v1508, %v1604
        %v1621 = vmax.f32 %v1511, %v1605
        %v1622 = vmax.f32 %v1516, %v1606
        %v1623 = vmax.f32 %v1519, %v1607
        %v1624 = vmax.f32 %v1524, %v1608
        %v1625 = vmax.f32 %v1527, %v1609
        %v1626 = vsub.f32 %v1468, %v1610
        %v1627 = vsub.f32 %v1471, %v1611
        %v1628 = vsub.f32 %v1476, %v1612
        %v1629 = vsub.f32 %v1479, %v1613
        %v1630 = vsub.f32 %v1484, %v1614
        %v1631 = vsub.f32 %v1487, %v1615
        %v1632 = vsub.f32 %v1492, %v1616
        %v1633 = vsub.f32 %v1495, %v1617
        %v1634 = vsub.f32 %v1500, %v1618
        %v1635 = vsub.f32 %v1503, %v1619
        %v1636 = vsub.f32 %v1508, %v1620
        %v1637 = vsub.f32 %v1511, %v1621
        %v1638 = vsub.f32 %v1516, %v1622
        %v1639 = vsub.f32 %v1519, %v1623
        %v1640 = vsub.f32 %v1524, %v1624
        %v1641 = vsub.f32 %v1527, %v1625
        %v1642 = vmul.f32 %v1626, 1.442695
        %v1643 = vpow.pop %v1642
        %v1644 = vmul.f32 %v1627, 1.442695
        %v1645 = vpow.pop %v1644
        %v1646 = vmul.f32 %v1628, 1.442695
        %v1647 = vpow.pop %v1646
        %v1648 = vmul.f32 %v1629, 1.442695
        %v1649 = vpow.pop %v1648
        %v1650 = vmul.f32 %v1630, 1.442695
        %v1651 = vpow.pop %v1650
        %v1652 = vmul.f32 %v1631, 1.442695
        %v1653 = vpow.pop %v1652
        %v1654 = vmul.f32 %v1632, 1.442695
        %v1655 = vpow.pop %v1654
        %v1656 = vmul.f32 %v1633, 1.442695
        %v1657 = vpow.pop %v1656
        %v1658 = vmul.f32 %v1634, 1.442695
        %v1659 = vpow.pop %v1658
        %v1660 = vmul.f32 %v1635, 1.442695
        %v1661 = vpow.pop %v1660
        %v1662 = vmul.f32 %v1636, 1.442695
        %v1663 = vpow.pop %v1662
        %v1664 = vmul.f32 %v1637, 1.442695
        %v1665 = vpow.pop %v1664
        %v1666 = vmul.f32 %v1638, 1.442695
        %v1667 = vpow.pop %v1666
        %v1668 = vmul.f32 %v1639, 1.442695
        %v1669 = vpow.pop %v1668
        %v1670 = vmul.f32 %v1640, 1.442695
        %v1671 = vpow.pop %v1670
        %v1672 = vmul.f32 %v1641, 1.442695
        %v1673 = vpow.pop %v1672
        %v1674 = vsub.f32 %v1594, %v1610
        %v1675 = vsub.f32 %v1595, %v1611
        %v1676 = vsub.f32 %v1596, %v1612
        %v1677 = vsub.f32 %v1597, %v1613
        %v1678 = vsub.f32 %v1598, %v1614
        %v1679 = vsub.f32 %v1599, %v1615
        %v1680 = vsub.f32 %v1600, %v1616
        %v1681 = vsub.f32 %v1601, %v1617
        %v1682 = vsub.f32 %v1602, %v1618
        %v1683 = vsub.f32 %v1603, %v1619
        %v1684 = vsub.f32 %v1604, %v1620
        %v1685 = vsub.f32 %v1605, %v1621
        %v1686 = vsub.f32 %v1606, %v1622
        %v1687 = vsub.f32 %v1607, %v1623
        %v1688 = vsub.f32 %v1608, %v1624
        %v1689 = vsub.f32 %v1609, %v1625
        %v1690 = vmul.f32 %v1674, 1.442695
        %v1691 = vpow.pop %v1690
        %v1692 = vmul.f32 %v1675, 1.442695
        %v1693 = vpow.pop %v1692
        %v1694 = vmul.f32 %v1676, 1.442695
        %v1695 = vpow.pop %v1694
        %v1696 = vmul.f32 %v1677, 1.442695
        %v1697 = vpow.pop %v1696
        %v1698 = vmul.f32 %v1678, 1.442695
        %v1699 = vpow.pop %v1698
        %v1700 = vmul.f32 %v1679, 1.442695
        %v1701 = vpow.pop %v1700
        %v1702 = vmul.f32 %v1680, 1.442695
        %v1703 = vpow.pop %v1702
        %v1704 = vmul.f32 %v1681, 1.442695
        %v1705 = vpow.pop %v1704
        %v1706 = vmul.f32 %v1682, 1.442695
        %v1707 = vpow.pop %v1706
        %v1708 = vmul.f32 %v1683, 1.442695
        %v1709 = vpow.pop %v1708
        %v1710 = vmul.f32 %v1684, 1.442695
        %v1711 = vpow.pop %v1710
        %v1712 = vmul.f32 %v1685, 1.442695
        %v1713 = vpow.pop %v1712
        %v1714 = vmul.f32 %v1686, 1.442695
        %v1715 = vpow.pop %v1714
        %v1716 = vmul.f32 %v1687, 1.442695
        %v1717 = vpow.pop %v1716
        %v1718 = vmul.f32 %v1688, 1.442695
        %v1719 = vpow.pop %v1718
        %v1720 = vmul.f32 %v1689, 1.442695
        %v1721 = vpow.pop %v1720
        %v1722 = vadd.f32 %v1643, %v1691
        %v1723 = vadd.f32 %v1645, %v1693
        %v1724 = vadd.f32 %v1647, %v1695
        %v1725 = vadd.f32 %v1649, %v1697
        %v1726 = vadd.f32 %v1651, %v1699
        %v1727 = vadd.f32 %v1653, %v1701
        %v1728 = vadd.f32 %v1655, %v1703
        %v1729 = vadd.f32 %v1657, %v1705
        %v1730 = vadd.f32 %v1659, %v1707
        %v1731 = vadd.f32 %v1661, %v1709
        %v1732 = vadd.f32 %v1663, %v1711
        %v1733 = vadd.f32 %v1665, %v1713
        %v1734 = vadd.f32 %v1667, %v1715
        %v1735 = vadd.f32 %v1669, %v1717
        %v1736 = vadd.f32 %v1671, %v1719
        %v1737 = vadd.f32 %v1673, %v1721
        %v1738 = vrcp.pop %v1722
        %v1739 = vrcp.pop %v1723
        %v1740 = vrcp.pop %v1724
        %v1741 = vrcp.pop %v1725
        %v1742 = vrcp.pop %v1726
        %v1743 = vrcp.pop %v1727
        %v1744 = vrcp.pop %v1728
        %v1745 = vrcp.pop %v1729
        %v1746 = vrcp.pop %v1730
        %v1747 = vrcp.pop %v1731
        %v1748 = vrcp.pop %v1732
        %v1749 = vrcp.pop %v1733
        %v1750 = vrcp.pop %v1734
        %v1751 = vrcp.pop %v1735
        %v1752 = vrcp.pop %v1736
        %v1753 = vrcp.pop %v1737
        %v1754 = vlaneseq
        %v1755 = vand.u32 %v1754, 127
        %vm1756 = vcmp.lt.s32.totalorder %v1755, 6
        %v1757 = vmul.f32 %v1643, %v1738
        %v1758 = vmul.f32 %v1645, %v1739
        %v1759 = vmul.f32 %v1647, %v1740
        %v1760 = vmul.f32 %v1649, %v1741
        %v1761 = vmul.f32 %v1651, %v1742
        %v1762 = vmul.f32 %v1653, %v1743
        %v1763 = vmul.f32 %v1655, %v1744
        %v1764 = vmul.f32 %v1657, %v1745
        %v1765 = vmul.f32 %v1659, %v1746
        %v1766 = vmul.f32 %v1661, %v1747
        %v1767 = vmul.f32 %v1663, %v1748
        %v1768 = vmul.f32 %v1665, %v1749
        %v1769 = vmul.f32 %v1667, %v1750
        %v1770 = vmul.f32 %v1669, %v1751
        %v1771 = vmul.f32 %v1671, %v1752
        %v1772 = vmul.f32 %v1673, %v1753
        %v1773 = vsel %vm1756, %v1757, %v1468
        %v1774 = vsel %vm1756, %v1758, %v1471
        %v1775 = vsel %vm1756, %v1759, %v1476
        %v1776 = vsel %vm1756, %v1760, %v1479
        %v1777 = vsel %vm1756, %v1761, %v1484
        %v1778 = vsel %vm1756, %v1762, %v1487
        %v1779 = vsel %vm1756, %v1763, %v1492
        %v1780 = vsel %vm1756, %v1764, %v1495
        %v1781 = vsel %vm1756, %v1765, %v1500
        %v1782 = vsel %vm1756, %v1766, %v1503
        %v1783 = vsel %vm1756, %v1767, %v1508
        %v1784 = vsel %vm1756, %v1768, %v1511
        %v1785 = vsel %vm1756, %v1769, %v1516
        %v1786 = vsel %vm1756, %v1770, %v1519
        %v1787 = vsel %vm1756, %v1771, %v1524
        %v1788 = vsel %vm1756, %v1772, %v1527
        %1789 = vst [vmem:[%s163] sm:$0xff] %v1773
        %1790 = vst [vmem:[%s163 + $0x8] sm:$0xff] %v1774
        %1791 = vst [vmem:[%s163 + $0x10] sm:$0xff] %v1775
        %1792 = vst [vmem:[%s163 + $0x18] sm:$0xff] %v1776
        %1793 = vst [vmem:[%s163 + $0x20] sm:$0xff] %v1777
        %1794 = vst [vmem:[%s163 + $0x28] sm:$0xff] %v1778
        %1795 = vst [vmem:[%s163 + $0x30] sm:$0xff] %v1779
        %1796 = vst [vmem:[%s163 + $0x38] sm:$0xff] %v1780
        %1797 = vst [vmem:[%s163 + $0x40] sm:$0xff] %v1781
        %1798 = vst [vmem:[%s163 + $0x48] sm:$0xff] %v1782
        %1799 = vst [vmem:[%s163 + $0x50] sm:$0xff] %v1783
        %1800 = vst [vmem:[%s163 + $0x58] sm:$0xff] %v1784
        %1801 = vst [vmem:[%s163 + $0x60] sm:$0xff] %v1785
        %1802 = vst [vmem:[%s163 + $0x68] sm:$0xff] %v1786
        %1803 = vst [vmem:[%s163 + $0x70] sm:$0xff] %v1787
        %1804 = vst [vmem:[%s163 + $0x78] sm:$0xff] %v1788
        %s1805 = sand.u32 %s93, 1
        %s1806 = scalar_lea.sflag [#allocation3], %s1805
        %s1807 = sand.u32 %s93, 1
        %s1808 = smul.addr %s1807, 128
        %s1809 = scalar_lea.vmem [#allocation2], %s1808
        // Predicated region
        $region33: #{tpu_custom_call.1} parent=31 // pred_check
          %p1810 = pneg %p103
        $region34: #{tpu_custom_call.1} parent=31 // pred_check_branch
          %1812 = sbr.rel (%p1810) target = $region36
        $region35: #{tpu_custom_call.1} parent=31 // pred_region
          %s1814 = ssub.s32 2048, 2048
          %1815 = vsyncadd %s1806, %s1814
          %s1816 = smul.addr %s17, 16
          %s1817 = smul.addr %s1816, 128
          %s1818 = scalar_lea.hbm %s3, %s1817
          %s1819 = sshll.u32 %s1809, 4
          %s1820 = int_to_ptr.vmem [resolvable:$true] %s1819
          %1825 = dma.vmem_to_hbm [thread:$0]  %s1820, 2048, %s1818, %s1806, 128, 128, 8
        $region36: #{tpu_custom_call.1} parent=31 // pred_fallthru
          _
      $region32: #{tpu_custom_call.1} parent=5 // pred_fallthru
        _
      %p1826 = scmp.le.s32.totalorder 2, %s12
      // Predicated region
      $region37: #{tpu_custom_call.1} parent=5 // pred_check
        %p1827 = pneg %p1826
      $region38: #{tpu_custom_call.1} parent=5 // pred_check_branch
        %1829 = sbr.rel (%p1827) target = $region40
      $region39: #{tpu_custom_call.1} parent=5 // pred_region
        %s1830 = ssub.s32 %s12, 2
        // Predicated region
        $region41: #{tpu_custom_call.1} parent=39 // pred_check
          %p1831 = pneg %p109
        $region42: #{tpu_custom_call.1} parent=39 // pred_check_branch
          %1833 = sbr.rel (%p1831) target = $region44
        $region43: #{tpu_custom_call.1} parent=39 // pred_region
          %s1834 = sand.u32 %s94, 1
          %s1835 = scalar_lea.sflag [#allocation3], %s1834
          %s1836 = sand.u32 %s94, 1
          %s1837 = smul.addr %s1836, 128
          %s1838 = scalar_lea.vmem [#allocation2], %s1837
          %1839 = dma.done %s1835, 2048
        $region44: #{tpu_custom_call.1} parent=39 // pred_fallthru
          _
      $region40: #{tpu_custom_call.1} parent=5 // pred_fallthru
        _
    $region6: #{tpu_custom_call.1} parent=1 // loop_footer
      %s16 = sadd.s32 1, %s12
    $region7: #{tpu_custom_call.1} parent=1 // loop_footer_branch
      %11 = sbr.rel target = $region3
    $region8: #{tpu_custom_call.1} parent=1 // loop_exit
      _
    %1840 = vsyncpa [#allocation3], 1
    %s1841 = scalar_lea.sflag [#allocation3], 1
    %1842 = vsyncpa %s1841, 1

</llo_original>
